<compile_context>
chip_gen: v6e
topology: v6e:2x2x1
jax: 0.10.0
libtpu: 0.0.40
codegen_flags: <defaults>
</compile_context>

<pallas_src>
import functools

import jax
import jax.numpy as jnp
from jax import lax
from jax.experimental import pallas as pl
from jax.experimental.pallas import tpu as pltpu

GEM_EPS = 1e-6
BN_EPS = 1e-5
VMEM_LIMIT = 32 * 1024 * 1024


# --------------------------------------------------------------------------
# GeM: avg_pool2d(clamp(y, eps)^p, 2, stride=2)^(1/p), applied to (H, W, C).
# --------------------------------------------------------------------------
def _gem_pool(y, p, inv_p):
    H, W, C = y.shape
    H2, W2 = H // 2, W // 2
    y = jnp.maximum(y, GEM_EPS)
    y = jnp.exp(p * jnp.log(y))                    # clamp(min=eps) ** p
    y = y[0:2 * H2, 0:2 * W2, :]                   # avg_pool2d drops odd row/col
    y = y.reshape(H2, 2, 2 * W2, C)                # split leading dim only
    y = y[:, 0] + y[:, 1]                          # pool over H
    y = y.reshape(H2, W2, 2, C)
    y = (y[:, :, 0, :] + y[:, :, 1, :]) * 0.25     # pool over W + mean
    return jnp.exp(jnp.log(y) * inv_p)             # ** (1/p)


# --------------------------------------------------------------------------
# Stage 0: Conv2d(1->64, 3x3, pad=1) + folded BN + ReLU + residual + GeM(2x2)
# Input block is (1, 1, H, W): time on lanes, no size-1 lane dim.
# --------------------------------------------------------------------------
def _stage0_kernel(x_ref, w_ref, scale_ref, bias_ref, p_ref, o_ref, xp_ref,
                   *, H, W, C):
    p = p_ref[0]
    inv_p = 1.0 / p

    # In-kernel 1-pixel zero halo (single channel -> tiny (H+2, W+2) scratch).
    xp_ref[...] = jnp.zeros_like(xp_ref)
    xp_ref[1:H + 1, 1:W + 1] = x_ref[0, 0]

    acc = jnp.zeros((H, W, C), jnp.float32)
    ident = None
    for dx in range(3):
        col = xp_ref[:, dx:dx + W]                 # (H+2, W)
        col3 = col[:, :, None]                     # -> (H+2, W, 1), once per dx
        if dx == 1:
            ident = col3[1:H + 1]                  # centered identity (H, W, 1)
        for dy in range(3):
            # (H, W, 1) * (1, C) broadcast-FMA on the VPU.
            acc = acc + col3[dy:dy + H] * w_ref[dy, dx]

    y = acc * scale_ref[...] + bias_ref[...]       # folded BN (+ conv bias)
    y = jnp.maximum(y, 0.0)                        # ReLU
    y = y + ident                                  # x += identity (broadcast over C)
    o_ref[0] = _gem_pool(y, p, inv_p)


def conv_stage0(x_nchw, w_hwio, scale, bias, p):
    B, _, H, W = x_nchw.shape
    C = w_hwio.shape[-1]
    H2, W2 = H // 2, W // 2
    kernel = functools.partial(_stage0_kernel, H=H, W=W, C=C)
    return pl.pallas_call(
        kernel,
        out_shape=jax.ShapeDtypeStruct((B, H2, W2, C), jnp.float32),
        grid=(B,),
        in_specs=[
            pl.BlockSpec((1, 1, H, W), lambda b: (b, 0, 0, 0)),
            pl.BlockSpec((3, 3, 1, C), lambda b: (0, 0, 0, 0)),
            pl.BlockSpec((1, C), lambda b: (0, 0)),
            pl.BlockSpec((1, C), lambda b: (0, 0)),
            pl.BlockSpec(memory_space=pltpu.MemorySpace.SMEM),
        ],
        out_specs=pl.BlockSpec((1, H2, W2, C), lambda b: (b, 0, 0, 0)),
        scratch_shapes=[pltpu.VMEM((H + 2, W + 2), jnp.float32)],
        compiler_params=pltpu.CompilerParams(
            dimension_semantics=("parallel",),
            vmem_limit_bytes=VMEM_LIMIT),
    )(x_nchw, w_hwio, scale, bias, p)


# --------------------------------------------------------------------------
# Stages 1/2: Conv2d(64->64, 3x3, pad=1) via a single fused im2col matmul
# + folded BN + ReLU + residual + GeM(2x2).  The last stage can emit the
# GRU layout (T, D*C) directly (lane-dense, feature index = d*C + c).
# --------------------------------------------------------------------------
def _stage_kernel(x_ref, w_ref, scale_ref, bias_ref, p_ref, o_ref, patches_ref,
                  *, H, W, C, fuse_seq_out):
    p = p_ref[0]
    inv_p = 1.0 / p

    # Build the im2col slab (H, W, 9*C) once; halo handled by zero-fill +
    # valid sub-rectangle writes (no wrapper pad, no padded image scratch).
    patches_ref[...] = jnp.zeros_like(patches_ref)
    for dy in range(3):
        oh_lo, oh_hi = max(0, 1 - dy), min(H, H + 1 - dy)
        ih_lo, ih_hi = oh_lo + dy - 1, oh_hi + dy - 1
        for dx in range(3):
            ow_lo, ow_hi = max(0, 1 - dx), min(W, W + 1 - dx)
            iw_lo, iw_hi = ow_lo + dx - 1, ow_hi + dx - 1
            k = dy * 3 + dx
            patches_ref[oh_lo:oh_hi, ow_lo:ow_hi, k * C:(k + 1) * C] = (
                x_ref[0, ih_lo:ih_hi, iw_lo:iw_hi, :].astype(jnp.bfloat16))

    # One K=9*C matmul instead of 9 K=C matmuls (bf16 MXU, f32 accumulate).
    pat = patches_ref[...].reshape(H * W, 9 * C)
    y = jnp.dot(pat, w_ref[...], preferred_element_type=jnp.float32)
    y = y.reshape(H, W, C)

    y = y * scale_ref[...] + bias_ref[...]          # folded BN (+ conv bias)
    y = jnp.maximum(y, 0.0)                         # ReLU
    y = y + x_ref[0]                                # exact residual (cin == cout)

    pooled = _gem_pool(y, p, inv_p)                 # (H//2, W//2, C)

    if fuse_seq_out:
        # Emit (T, D*C) with feature = d*C + c  (== permute(0,3,2,1).reshape).
        H2 = H // 2
        for d in range(H2):
            o_ref[0, :, d * C:(d + 1) * C] = pooled[d]
    else:
        o_ref[0] = pooled


def conv_stage(x, w_im2col, scale, bias, p, fuse_seq_out):
    B, H, W, C = x.shape
    H2, W2 = H // 2, W // 2
    if fuse_seq_out:
        out_shape = jax.ShapeDtypeStruct((B, W2, H2 * C), jnp.float32)
        out_spec = pl.BlockSpec((1, W2, H2 * C), lambda b: (b, 0, 0))
    else:
        out_shape = jax.ShapeDtypeStruct((B, H2, W2, C), jnp.float32)
        out_spec = pl.BlockSpec((1, H2, W2, C), lambda b: (b, 0, 0, 0))
    kernel = functools.partial(_stage_kernel, H=H, W=W, C=C,
                               fuse_seq_out=fuse_seq_out)
    return pl.pallas_call(
        kernel,
        out_shape=out_shape,
        grid=(B,),
        in_specs=[
            pl.BlockSpec((1, H, W, C), lambda b: (b, 0, 0, 0)),
            pl.BlockSpec((9 * C, C), lambda b: (0, 0)),
            pl.BlockSpec((1, C), lambda b: (0, 0)),
            pl.BlockSpec((1, C), lambda b: (0, 0)),
            pl.BlockSpec(memory_space=pltpu.MemorySpace.SMEM),
        ],
        out_specs=out_spec,
        scratch_shapes=[pltpu.VMEM((H, W, 9 * C), jnp.bfloat16)],
        compiler_params=pltpu.CompilerParams(
            dimension_semantics=("parallel",),
            vmem_limit_bytes=VMEM_LIMIT),
    )(x, w_im2col, scale, bias, p)


# --------------------------------------------------------------------------
# Bidirectional GRU (PyTorch gate order [r, z, n]) + concat + Linear + ReLU.
# Grid over batch (parallel -> both TCs on v7x).  Input projection for both
# directions is hoisted out of the recurrence; forward/backward are fused in
# one unrolled loop; MXU operands are bf16, gate math is f32.
# --------------------------------------------------------------------------
def _gru_linear_kernel(x_ref, wih_ref, whh_f_ref, whh_b_ref, bias_ref,
                       bhn_f_ref, bhn_b_ref, wl_f_ref, wl_b_ref, bl_ref,
                       o_ref, gi_ref):
    T = x_ref.shape[1]
    d = whh_f_ref.shape[0]

    # Hoisted input projection: one (T, F) @ (F, 6d) matmul; b_i (+ b_hr, b_hz)
    # folded into the bias so only b_hn remains inside the recurrence.
    x = x_ref[0].astype(jnp.bfloat16)                       # (T, F)
    gi_ref[...] = (jnp.dot(x, wih_ref[...],
                           preferred_element_type=jnp.float32)
                   + bias_ref[...])

    whh_f = whh_f_ref[...]
    whh_b = whh_b_ref[...]
    bhn_f = bhn_f_ref[...]
    bhn_b = bhn_b_ref[...]

    def step(i, carry):
        h_f, h_b = carry
        gf = gi_ref[pl.ds(i, 1), :]                         # (1, 6d)
        gb = gi_ref[pl.ds(T - 1 - i, 1), :]                 # (1, 6d)
        gh_f = jnp.dot(h_f.astype(jnp.bfloat16), whh_f,
                       preferred_element_type=jnp.float32)  # (1, 3d)
        gh_b = jnp.dot(h_b.astype(jnp.bfloat16), whh_b,
                       preferred_element_type=jnp.float32)
        # forward direction
        r_f = jax.nn.sigmoid(gf[:, 0:d] + gh_f[:, 0:d])
        z_f = jax.nn.sigmoid(gf[:, d:2 * d] + gh_f[:, d:2 * d])
        n_f = jnp.tanh(gf[:, 2 * d:3 * d] + r_f * (gh_f[:, 2 * d:3 * d] + bhn_f))
        h_f = (1.0 - z_f) * n_f + z_f * h_f
        # backward direction
        r_b = jax.nn.sigmoid(gb[:, 3 * d:4 * d] + gh_b[:, 0:d])
        z_b = jax.nn.sigmoid(gb[:, 4 * d:5 * d] + gh_b[:, d:2 * d])
        n_b = jnp.tanh(gb[:, 5 * d:6 * d] + r_b * (gh_b[:, 2 * d:3 * d] + bhn_b))
        h_b = (1.0 - z_b) * n_b + z_b * h_b
        return (h_f, h_b)

    h0 = jnp.zeros((1, d), jnp.float32)
    h_f, h_b = lax.fori_loop(0, T, step, (h0, h0), unroll=True)

    # cat([h_f, h_b], -1) @ W_lin.T + b  ==  h_f @ W[:, :d].T + h_b @ W[:, d:].T + b
    z = (jnp.dot(h_f.astype(jnp.bfloat16), wl_f_ref[...],
                 preferred_element_type=jnp.float32)
         + jnp.dot(h_b.astype(jnp.bfloat16), wl_b_ref[...],
                   preferred_element_type=jnp.float32)
         + bl_ref[...])
    o_ref[0] = jnp.maximum(z, 0.0)


def gru_bi_linear_relu(seq, gru_p, lin_p):
    B, T, F = seq.shape
    d = gru_p["whh_f"].shape[0]
    d_out = lin_p["b"].shape[-1]
    rep2 = lambda b: (0, 0)
    out = pl.pallas_call(
        _gru_linear_kernel,
        out_shape=jax.ShapeDtypeStruct((B, 1, d_out), jnp.float32),
        grid=(B,),
        in_specs=[
            pl.BlockSpec((1, T, F), lambda b: (b, 0, 0)),
            pl.BlockSpec((F, 6 * d), rep2),
            pl.BlockSpec((d, 3 * d), rep2),
            pl.BlockSpec((d, 3 * d), rep2),
            pl.BlockSpec((1, 6 * d), rep2),
            pl.BlockSpec((1, d), rep2),
            pl.BlockSpec((1, d), rep2),
            pl.BlockSpec((d, d), rep2),
            pl.BlockSpec((d, d), rep2),
            pl.BlockSpec((1, d_out), rep2),
        ],
        out_specs=pl.BlockSpec((1, 1, d_out), lambda b: (b, 0, 0)),
        scratch_shapes=[pltpu.VMEM((T, 6 * d), jnp.float32)],
        compiler_params=pltpu.CompilerParams(
            dimension_semantics=("parallel",),
            vmem_limit_bytes=VMEM_LIMIT),
    )(seq, gru_p["wih"], gru_p["whh_f"], gru_p["whh_b"], gru_p["bias"],
      gru_p["bhn_f"], gru_p["bhn_b"], lin_p["w_f"], lin_p["w_b"], lin_p["b"])
    return out.reshape(B, d_out)


# --------------------------------------------------------------------------
# Full forward + parameter init
# --------------------------------------------------------------------------
def crnn_block_forward(x_nchw, params):
    x = x_nchw.astype(jnp.float32)                          # (B, 1, n_mels, time)
    h = conv_stage0(x, params["conv0_w"], params["conv0_scale"],
                    params["conv0_bias"], params["gem0_p"])
    h = conv_stage(h, params["conv1_w"], params["conv1_scale"],
                   params["conv1_bias"], params["gem1_p"], fuse_seq_out=False)
    seq = conv_stage(h, params["conv2_w"], params["conv2_scale"],
                     params["conv2_bias"], params["gem2_p"], fuse_seq_out=True)
    # seq is already (B, T, D*C) with feature = d*C + c (no wrapper transposes).
    return gru_bi_linear_relu(seq, params["gru"], params["lin"])


def init_params(key, n_mels, d, num_class):
    del num_class  # only feeds the unused GRUCell branch
    assert 2 * d == 512, "nn.Linear(512, d) in the reference forces d == 256"

    def rnd(k, shape, s=0.05):
        return jax.random.normal(k, shape, jnp.float32) * s

    ks = jax.random.split(key, 4)
    params = {}
    chans = [(1, 64), (64, 64), (64, 64)]
    ck = jax.random.split(ks[0], 6)
    for i, (cin, cout) in enumerate(chans):
        w = rnd(ck[2 * i], (cout, cin, 3, 3))               # PyTorch OIHW
        b = rnd(ck[2 * i + 1], (cout,))
        # BatchNorm2d defaults (eval mode): gamma=1, beta=0, mean=0, var=1
        scale = jnp.ones((cout,), jnp.float32) / jnp.sqrt(1.0 + BN_EPS)
        bias = b * scale
        w_hwio = jnp.transpose(w, (2, 3, 1, 0))             # (3, 3, cin, cout)
        if cin == 1:
            params[f"conv{i}_w"] = w_hwio                   # f32 (VPU path)
        else:
            # im2col weight: row (dy*3+dx)*cin + ci -> W_torch[co, ci, dy, dx]
            params[f"conv{i}_w"] = w_hwio.reshape(9 * cin, cout).astype(jnp.bfloat16)
        params[f"conv{i}_scale"] = scale.reshape(1, cout)
        params[f"conv{i}_bias"] = bias.reshape(1, cout)
        params[f"gem{i}_p"] = jnp.full((1,), 3.0, jnp.float32)

    F = 64 * (n_mels // 8)
    gk = jax.random.split(ks[1], 8)
    wih_f = rnd(gk[0], (3 * d, F))
    whh_f = rnd(gk[1], (3 * d, d))
    bi_f = rnd(gk[2], (3 * d,))
    bh_f = rnd(gk[3], (3 * d,))
    wih_b = rnd(gk[4], (3 * d, F))
    whh_b = rnd(gk[5], (3 * d, d))
    bi_b = rnd(gk[6], (3 * d,))
    bh_b = rnd(gk[7], (3 * d,))

    def hoisted_bias(bi, bh):
        # b_ir/b_iz/b_in + b_hr/b_hz folded; b_hn stays inside r * (.) per step.
        return bi + jnp.concatenate([bh[:2 * d], jnp.zeros((d,), jnp.float32)])

    params["gru"] = {
        "wih": jnp.concatenate([wih_f.T, wih_b.T], axis=1).astype(jnp.bfloat16),
        "whh_f": whh_f.T.astype(jnp.bfloat16),              # (d, 3d)
        "whh_b": whh_b.T.astype(jnp.bfloat16),
        "bias": jnp.concatenate([hoisted_bias(bi_f, bh_f),
                                 hoisted_bias(bi_b, bh_b)]).reshape(1, 6 * d),
        "bhn_f": bh_f[2 * d:].reshape(1, d),
        "bhn_b": bh_b[2 * d:].reshape(1, d),
    }

    lk = jax.random.split(ks[2], 2)
    wlin = rnd(lk[0], (d, 512))                             # nn.Linear(512, d).weight
    blin = rnd(lk[1], (d,))
    params["lin"] = {
        "w_f": wlin[:, :d].T.astype(jnp.bfloat16),          # acts on forward hidden
        "w_b": wlin[:, d:].T.astype(jnp.bfloat16),          # acts on backward hidden
        "b": blin.reshape(1, d),
    }
    return params


if __name__ == "__main__":
    n_mels, d, num_class = 16, 256, 10
    B, time_steps = 2, 16

    key = jax.random.PRNGKey(0)
    kx, kp = jax.random.split(key)
    x = jax.random.normal(kx, (B, 1, n_mels, time_steps), jnp.float32)
    params = init_params(kp, n_mels, d, num_class)

    z = crnn_block_forward(x, params)
    z = jax.block_until_ready(z)
    assert z.shape == (B, d) and z.dtype == jnp.float32
    print("KERNEL_OK")
</pallas_src>

<mosaic_0001>
module attributes {stable_mosaic.version = 11 : i64} {
  func.func @_stage0_kernel(%arg0: i32, %arg1: memref<1x1x16x16xf32, #tpu.memory_space<vmem>>, %arg2: memref<3x3x1x64xf32, #tpu.memory_space<vmem>>, %arg3: memref<1x64xf32, #tpu.memory_space<vmem>>, %arg4: memref<1x64xf32, #tpu.memory_space<vmem>>, %arg5: memref<1xf32, #tpu.memory_space<smem>>, %arg6: memref<1x8x8x64xf32, #tpu.memory_space<vmem>>, %arg7: memref<18x18xf32, #tpu.memory_space<vmem>>) attributes {dimension_semantics = [#tpu.dimension_semantics<parallel>], iteration_bounds = array<i64: 2>, scalar_prefetch = 0 : i64, scratch_operands = 1 : i64, tpu.core_type = #tpu.core_type<tc>, window_params = [{transform_indices = @transform_0, window_bounds = array<i64: 1, 1, 16, 16>}, {pipeline_mode = #tpu.pipeline_mode<synchronous>, transform_indices = @transform_1, window_bounds = array<i64: 3, 3, 1, 64>}, {pipeline_mode = #tpu.pipeline_mode<synchronous>, transform_indices = @transform_2, window_bounds = array<i64: 1, 64>}, {pipeline_mode = #tpu.pipeline_mode<synchronous>, transform_indices = @transform_3, window_bounds = array<i64: 1, 64>}, {transform_indices = @transform_4, window_bounds = array<i64: 1>}, {transform_indices = @transform_5, window_bounds = array<i64: 1, 8, 8, 64>}]} {
    %c0 = arith.constant 0 : index
    %0 = memref.load %arg5[%c0] : memref<1xf32, #tpu.memory_space<smem>>
    %cst = arith.constant 1.000000e+00 : f32
    %1 = arith.divf %cst, %0 : f32
    %cst_0 = arith.constant 0.000000e+00 : f32
    %2 = vector.broadcast %cst_0 : f32 to vector<18x18xf32>
    %c0_1 = arith.constant 0 : index
    %c0_2 = arith.constant 0 : index
    %3 = vector.load %arg7[%c0_1, %c0_2] : memref<18x18xf32, #tpu.memory_space<vmem>>, vector<18x18xf32>
    tpu.vector_store %arg7[%c0_1, %c0_2], %2 {strides = array<i32>} : memref<18x18xf32, #tpu.memory_space<vmem>>, vector<18x18xf32>,
    %c0_3 = arith.constant 0 : index
    %c0_4 = arith.constant 0 : index
    %c0_5 = arith.constant 0 : index
    %c0_6 = arith.constant 0 : index
    %4 = vector.load %arg1[%c0_3, %c0_4, %c0_5, %c0_6] : memref<1x1x16x16xf32, #tpu.memory_space<vmem>>, vector<1x1x16x16xf32>
    %5 = vector.shape_cast %4 : vector<1x1x16x16xf32> to vector<16x16xf32>
    %c1 = arith.constant 1 : index
    %c1_7 = arith.constant 1 : index
    %6 = vector.load %arg7[%c1, %c1_7] : memref<18x18xf32, #tpu.memory_space<vmem>>, vector<16x16xf32>
    tpu.vector_store %arg7[%c1, %c1_7], %5 {strides = array<i32>} : memref<18x18xf32, #tpu.memory_space<vmem>>, vector<16x16xf32>,
    %cst_8 = arith.constant 0.000000e+00 : f32
    %7 = vector.broadcast %cst_8 : f32 to vector<16x16x64xf32>
    %c0_9 = arith.constant 0 : index
    %c0_10 = arith.constant 0 : index
    %8 = vector.load %arg7[%c0_9, %c0_10] : memref<18x18xf32, #tpu.memory_space<vmem>>, vector<18x16xf32>
    %9 = vector.shape_cast %8 : vector<18x16xf32> to vector<18x16x1xf32>
    %10 = vector.extract_strided_slice %9 {offsets = [0, 0, 0], sizes = [16, 16, 1], strides = [1, 1, 1]} : vector<18x16x1xf32> to vector<16x16x1xf32>
    %c0_11 = arith.constant 0 : index
    %c0_12 = arith.constant 0 : index
    %c0_13 = arith.constant 0 : index
    %c0_14 = arith.constant 0 : index
    %11 = vector.load %arg2[%c0_11, %c0_12, %c0_13, %c0_14] : memref<3x3x1x64xf32, #tpu.memory_space<vmem>>, vector<1x1x1x64xf32>
    %12 = vector.shape_cast %11 : vector<1x1x1x64xf32> to vector<1x64xf32>
    %13 = vector.shape_cast %12 : vector<1x64xf32> to vector<1x1x64xf32>
    %14 = vector.broadcast %10 : vector<16x16x1xf32> to vector<16x16x64xf32>
    %15 = vector.broadcast %13 : vector<1x1x64xf32> to vector<16x16x64xf32>
    %16 = arith.mulf %14, %15 : vector<16x16x64xf32>
    %17 = arith.addf %7, %16 : vector<16x16x64xf32>
    %18 = vector.extract_strided_slice %9 {offsets = [1, 0, 0], sizes = [16, 16, 1], strides = [1, 1, 1]} : vector<18x16x1xf32> to vector<16x16x1xf32>
    %c1_15 = arith.constant 1 : index
    %c0_16 = arith.constant 0 : index
    %c0_17 = arith.constant 0 : index
    %c0_18 = arith.constant 0 : index
    %19 = vector.load %arg2[%c1_15, %c0_16, %c0_17, %c0_18] : memref<3x3x1x64xf32, #tpu.memory_space<vmem>>, vector<1x1x1x64xf32>
    %20 = vector.shape_cast %19 : vector<1x1x1x64xf32> to vector<1x64xf32>
    %21 = vector.shape_cast %20 : vector<1x64xf32> to vector<1x1x64xf32>
    %22 = vector.broadcast %18 : vector<16x16x1xf32> to vector<16x16x64xf32>
    %23 = vector.broadcast %21 : vector<1x1x64xf32> to vector<16x16x64xf32>
    %24 = arith.mulf %22, %23 : vector<16x16x64xf32>
    %25 = arith.addf %17, %24 : vector<16x16x64xf32>
    %26 = vector.extract_strided_slice %9 {offsets = [2, 0, 0], sizes = [16, 16, 1], strides = [1, 1, 1]} : vector<18x16x1xf32> to vector<16x16x1xf32>
    %c2 = arith.constant 2 : index
    %c0_19 = arith.constant 0 : index
    %c0_20 = arith.constant 0 : index
    %c0_21 = arith.constant 0 : index
    %27 = vector.load %arg2[%c2, %c0_19, %c0_20, %c0_21] : memref<3x3x1x64xf32, #tpu.memory_space<vmem>>, vector<1x1x1x64xf32>
    %28 = vector.shape_cast %27 : vector<1x1x1x64xf32> to vector<1x64xf32>
    %29 = vector.shape_cast %28 : vector<1x64xf32> to vector<1x1x64xf32>
    %30 = vector.broadcast %26 : vector<16x16x1xf32> to vector<16x16x64xf32>
    %31 = vector.broadcast %29 : vector<1x1x64xf32> to vector<16x16x64xf32>
    %32 = arith.mulf %30, %31 : vector<16x16x64xf32>
    %33 = arith.addf %25, %32 : vector<16x16x64xf32>
    %c0_22 = arith.constant 0 : index
    %c1_23 = arith.constant 1 : index
    %34 = vector.load %arg7[%c0_22, %c1_23] : memref<18x18xf32, #tpu.memory_space<vmem>>, vector<18x16xf32>
    %35 = vector.shape_cast %34 : vector<18x16xf32> to vector<18x16x1xf32>
    %36 = vector.extract_strided_slice %35 {offsets = [1, 0, 0], sizes = [16, 16, 1], strides = [1, 1, 1]} : vector<18x16x1xf32> to vector<16x16x1xf32>
    %37 = vector.extract_strided_slice %35 {offsets = [0, 0, 0], sizes = [16, 16, 1], strides = [1, 1, 1]} : vector<18x16x1xf32> to vector<16x16x1xf32>
    %c0_24 = arith.constant 0 : index
    %c1_25 = arith.constant 1 : index
    %c0_26 = arith.constant 0 : index
    %c0_27 = arith.constant 0 : index
    %38 = vector.load %arg2[%c0_24, %c1_25, %c0_26, %c0_27] : memref<3x3x1x64xf32, #tpu.memory_space<vmem>>, vector<1x1x1x64xf32>
    %39 = vector.shape_cast %38 : vector<1x1x1x64xf32> to vector<1x64xf32>
    %40 = vector.shape_cast %39 : vector<1x64xf32> to vector<1x1x64xf32>
    %41 = vector.broadcast %37 : vector<16x16x1xf32> to vector<16x16x64xf32>
    %42 = vector.broadcast %40 : vector<1x1x64xf32> to vector<16x16x64xf32>
    %43 = arith.mulf %41, %42 : vector<16x16x64xf32>
    %44 = arith.addf %33, %43 : vector<16x16x64xf32>
    %45 = vector.extract_strided_slice %35 {offsets = [1, 0, 0], sizes = [16, 16, 1], strides = [1, 1, 1]} : vector<18x16x1xf32> to vector<16x16x1xf32>
    %c1_28 = arith.constant 1 : index
    %c1_29 = arith.constant 1 : index
    %c0_30 = arith.constant 0 : index
    %c0_31 = arith.constant 0 : index
    %46 = vector.load %arg2[%c1_28, %c1_29, %c0_30, %c0_31] : memref<3x3x1x64xf32, #tpu.memory_space<vmem>>, vector<1x1x1x64xf32>
    %47 = vector.shape_cast %46 : vector<1x1x1x64xf32> to vector<1x64xf32>
    %48 = vector.shape_cast %47 : vector<1x64xf32> to vector<1x1x64xf32>
    %49 = vector.broadcast %45 : vector<16x16x1xf32> to vector<16x16x64xf32>
    %50 = vector.broadcast %48 : vector<1x1x64xf32> to vector<16x16x64xf32>
    %51 = arith.mulf %49, %50 : vector<16x16x64xf32>
    %52 = arith.addf %44, %51 : vector<16x16x64xf32>
    %53 = vector.extract_strided_slice %35 {offsets = [2, 0, 0], sizes = [16, 16, 1], strides = [1, 1, 1]} : vector<18x16x1xf32> to vector<16x16x1xf32>
    %c2_32 = arith.constant 2 : index
    %c1_33 = arith.constant 1 : index
    %c0_34 = arith.constant 0 : index
    %c0_35 = arith.constant 0 : index
    %54 = vector.load %arg2[%c2_32, %c1_33, %c0_34, %c0_35] : memref<3x3x1x64xf32, #tpu.memory_space<vmem>>, vector<1x1x1x64xf32>
    %55 = vector.shape_cast %54 : vector<1x1x1x64xf32> to vector<1x64xf32>
    %56 = vector.shape_cast %55 : vector<1x64xf32> to vector<1x1x64xf32>
    %57 = vector.broadcast %53 : vector<16x16x1xf32> to vector<16x16x64xf32>
    %58 = vector.broadcast %56 : vector<1x1x64xf32> to vector<16x16x64xf32>
    %59 = arith.mulf %57, %58 : vector<16x16x64xf32>
    %60 = arith.addf %52, %59 : vector<16x16x64xf32>
    %c0_36 = arith.constant 0 : index
    %c2_37 = arith.constant 2 : index
    %61 = vector.load %arg7[%c0_36, %c2_37] : memref<18x18xf32, #tpu.memory_space<vmem>>, vector<18x16xf32>
    %62 = vector.shape_cast %61 : vector<18x16xf32> to vector<18x16x1xf32>
    %63 = vector.extract_strided_slice %62 {offsets = [0, 0, 0], sizes = [16, 16, 1], strides = [1, 1, 1]} : vector<18x16x1xf32> to vector<16x16x1xf32>
    %c0_38 = arith.constant 0 : index
    %c2_39 = arith.constant 2 : index
    %c0_40 = arith.constant 0 : index
    %c0_41 = arith.constant 0 : index
    %64 = vector.load %arg2[%c0_38, %c2_39, %c0_40, %c0_41] : memref<3x3x1x64xf32, #tpu.memory_space<vmem>>, vector<1x1x1x64xf32>
    %65 = vector.shape_cast %64 : vector<1x1x1x64xf32> to vector<1x64xf32>
    %66 = vector.shape_cast %65 : vector<1x64xf32> to vector<1x1x64xf32>
    %67 = vector.broadcast %63 : vector<16x16x1xf32> to vector<16x16x64xf32>
    %68 = vector.broadcast %66 : vector<1x1x64xf32> to vector<16x16x64xf32>
    %69 = arith.mulf %67, %68 : vector<16x16x64xf32>
    %70 = arith.addf %60, %69 : vector<16x16x64xf32>
    %71 = vector.extract_strided_slice %62 {offsets = [1, 0, 0], sizes = [16, 16, 1], strides = [1, 1, 1]} : vector<18x16x1xf32> to vector<16x16x1xf32>
    %c1_42 = arith.constant 1 : index
    %c2_43 = arith.constant 2 : index
    %c0_44 = arith.constant 0 : index
    %c0_45 = arith.constant 0 : index
    %72 = vector.load %arg2[%c1_42, %c2_43, %c0_44, %c0_45] : memref<3x3x1x64xf32, #tpu.memory_space<vmem>>, vector<1x1x1x64xf32>
    %73 = vector.shape_cast %72 : vector<1x1x1x64xf32> to vector<1x64xf32>
    %74 = vector.shape_cast %73 : vector<1x64xf32> to vector<1x1x64xf32>
    %75 = vector.broadcast %71 : vector<16x16x1xf32> to vector<16x16x64xf32>
    %76 = vector.broadcast %74 : vector<1x1x64xf32> to vector<16x16x64xf32>
    %77 = arith.mulf %75, %76 : vector<16x16x64xf32>
    %78 = arith.addf %70, %77 : vector<16x16x64xf32>
    %79 = vector.extract_strided_slice %62 {offsets = [2, 0, 0], sizes = [16, 16, 1], strides = [1, 1, 1]} : vector<18x16x1xf32> to vector<16x16x1xf32>
    %c2_46 = arith.constant 2 : index
    %c2_47 = arith.constant 2 : index
    %c0_48 = arith.constant 0 : index
    %c0_49 = arith.constant 0 : index
    %80 = vector.load %arg2[%c2_46, %c2_47, %c0_48, %c0_49] : memref<3x3x1x64xf32, #tpu.memory_space<vmem>>, vector<1x1x1x64xf32>
    %81 = vector.shape_cast %80 : vector<1x1x1x64xf32> to vector<1x64xf32>
    %82 = vector.shape_cast %81 : vector<1x64xf32> to vector<1x1x64xf32>
    %83 = vector.broadcast %79 : vector<16x16x1xf32> to vector<16x16x64xf32>
    %84 = vector.broadcast %82 : vector<1x1x64xf32> to vector<16x16x64xf32>
    %85 = arith.mulf %83, %84 : vector<16x16x64xf32>
    %86 = arith.addf %78, %85 : vector<16x16x64xf32>
    %c0_50 = arith.constant 0 : index
    %c0_51 = arith.constant 0 : index
    %87 = vector.load %arg3[%c0_50, %c0_51] : memref<1x64xf32, #tpu.memory_space<vmem>>, vector<1x64xf32>
    %88 = vector.shape_cast %87 : vector<1x64xf32> to vector<1x1x64xf32>
    %89 = vector.broadcast %88 : vector<1x1x64xf32> to vector<16x16x64xf32>
    %90 = arith.mulf %86, %89 : vector<16x16x64xf32>
    %c0_52 = arith.constant 0 : index
    %c0_53 = arith.constant 0 : index
    %91 = vector.load %arg4[%c0_52, %c0_53] : memref<1x64xf32, #tpu.memory_space<vmem>>, vector<1x64xf32>
    %92 = vector.shape_cast %91 : vector<1x64xf32> to vector<1x1x64xf32>
    %93 = vector.broadcast %92 : vector<1x1x64xf32> to vector<16x16x64xf32>
    %94 = arith.addf %90, %93 : vector<16x16x64xf32>
    %cst_54 = arith.constant 0.000000e+00 : f32
    %95 = vector.broadcast %cst_54 : f32 to vector<16x16x64xf32>
    %96 = arith.maximumf %94, %95 : vector<16x16x64xf32>
    %97 = vector.broadcast %36 : vector<16x16x1xf32> to vector<16x16x64xf32>
    %98 = arith.addf %96, %97 : vector<16x16x64xf32>
    %cst_55 = arith.constant 9.99999997E-7 : f32
    %99 = vector.broadcast %cst_55 : f32 to vector<16x16x64xf32>
    %100 = arith.maximumf %98, %99 : vector<16x16x64xf32>
    %101 = math.log %100 : vector<16x16x64xf32>
    %102 = vector.broadcast %0 : f32 to vector<16x16x64xf32>
    %103 = arith.mulf %102, %101 : vector<16x16x64xf32>
    %104 = math.exp %103 : vector<16x16x64xf32>
    %105 = vector.shape_cast %104 : vector<16x16x64xf32> to vector<8x2x16x64xf32>
    %106 = vector.extract_strided_slice %105 {offsets = [0, 0, 0, 0], sizes = [8, 1, 16, 64], strides = [1, 1, 1, 1]} : vector<8x2x16x64xf32> to vector<8x1x16x64xf32>
    %107 = vector.shape_cast %106 : vector<8x1x16x64xf32> to vector<8x16x64xf32>
    %108 = vector.extract_strided_slice %105 {offsets = [0, 1, 0, 0], sizes = [8, 1, 16, 64], strides = [1, 1, 1, 1]} : vector<8x2x16x64xf32> to vector<8x1x16x64xf32>
    %109 = vector.shape_cast %108 : vector<8x1x16x64xf32> to vector<8x16x64xf32>
    %110 = arith.addf %107, %109 : vector<8x16x64xf32>
    %111 = vector.shape_cast %110 : vector<8x16x64xf32> to vector<8x8x2x64xf32>
    %112 = vector.extract_strided_slice %111 {offsets = [0, 0, 0, 0], sizes = [8, 8, 1, 64], strides = [1, 1, 1, 1]} : vector<8x8x2x64xf32> to vector<8x8x1x64xf32>
    %113 = vector.shape_cast %112 : vector<8x8x1x64xf32> to vector<8x8x64xf32>
    %114 = vector.extract_strided_slice %111 {offsets = [0, 0, 1, 0], sizes = [8, 8, 1, 64], strides = [1, 1, 1, 1]} : vector<8x8x2x64xf32> to vector<8x8x1x64xf32>
    %115 = vector.shape_cast %114 : vector<8x8x1x64xf32> to vector<8x8x64xf32>
    %116 = arith.addf %113, %115 : vector<8x8x64xf32>
    %cst_56 = arith.constant 2.500000e-01 : f32
    %117 = vector.broadcast %cst_56 : f32 to vector<8x8x64xf32>
    %118 = arith.mulf %116, %117 : vector<8x8x64xf32>
    %119 = math.log %118 : vector<8x8x64xf32>
    %120 = vector.broadcast %1 : f32 to vector<8x8x64xf32>
    %121 = arith.mulf %119, %120 : vector<8x8x64xf32>
    %122 = math.exp %121 : vector<8x8x64xf32>
    %c0_57 = arith.constant 0 : index
    %c0_58 = arith.constant 0 : index
    %c0_59 = arith.constant 0 : index
    %c0_60 = arith.constant 0 : index
    %123 = vector.load %arg6[%c0_57, %c0_58, %c0_59, %c0_60] : memref<1x8x8x64xf32, #tpu.memory_space<vmem>>, vector<1x8x8x64xf32>
    %124 = vector.shape_cast %123 : vector<1x8x8x64xf32> to vector<8x8x64xf32>
    %125 = vector.shape_cast %122 : vector<8x8x64xf32> to vector<1x8x8x64xf32>
    tpu.vector_store %arg6[%c0_57, %c0_58, %c0_59, %c0_60], %125 {strides = array<i32>} : memref<1x8x8x64xf32, #tpu.memory_space<vmem>>, vector<1x8x8x64xf32>,
    return
  }
  func.func @transform_0(%arg0: i32) -> (i32, i32, i32, i32) {
    %c0_i32 = arith.constant 0 : i32
    %c0_i32_0 = arith.constant 0 : i32
    %c0_i32_1 = arith.constant 0 : i32
    %c0_i32_2 = arith.constant 0 : i32
    return %arg0, %c0_i32, %c0_i32_0, %c0_i32_1 : i32, i32, i32, i32
  }
  func.func @transform_1(%arg0: i32) -> (i32, i32, i32, i32) {
    %c0_i32 = arith.constant 0 : i32
    %c0_i32_0 = arith.constant 0 : i32
    %c0_i32_1 = arith.constant 0 : i32
    %c0_i32_2 = arith.constant 0 : i32
    %c0_i32_3 = arith.constant 0 : i32
    return %c0_i32, %c0_i32_0, %c0_i32_1, %c0_i32_2 : i32, i32, i32, i32
  }
  func.func @transform_2(%arg0: i32) -> (i32, i32) {
    %c0_i32 = arith.constant 0 : i32
    %c0_i32_0 = arith.constant 0 : i32
    %c0_i32_1 = arith.constant 0 : i32
    return %c0_i32, %c0_i32_0 : i32, i32
  }
  func.func @transform_3(%arg0: i32) -> (i32, i32) {
    %c0_i32 = arith.constant 0 : i32
    %c0_i32_0 = arith.constant 0 : i32
    %c0_i32_1 = arith.constant 0 : i32
    return %c0_i32, %c0_i32_0 : i32, i32
  }
  func.func @transform_4(%arg0: i32) -> i32 {
    %c0_i32 = arith.constant 0 : i32
    %c0_i32_0 = arith.constant 0 : i32
    return %c0_i32 : i32
  }
  func.func @transform_5(%arg0: i32) -> (i32, i32, i32, i32) {
    %c0_i32 = arith.constant 0 : i32
    %c0_i32_0 = arith.constant 0 : i32
    %c0_i32_1 = arith.constant 0 : i32
    %c0_i32_2 = arith.constant 0 : i32
    return %arg0, %c0_i32, %c0_i32_0, %c0_i32_1 : i32, i32, i32, i32
  }
}

</mosaic_0001>

<llo_original>
// kernel: tpu_custom_call.1
$region0: #{tpu_custom_call.1}
  #allocation0 [shape = 'u32[]', space=smem, size = 0x4, offset = 0x4, fixed_abs, tag = 'smem constant byte address 0x4 - core index']
  #allocation1 [shape = 'u32[144,128]{1,0:T(1,128)}', space=vmem, size = 0x12000, scoped, tag = 'internal scratch']
  #allocation2 [shape = 'f32[18,18]{1,0:T(8,128)}', space=vmem, size = 0x3000, scoped, tag = 'scratch operand']
  #allocation3 [shape = 'f32[1]{0:T(128)S(6)}', space=smem, size = 0x200, scoped, tag = 'scoped memory for tpu_custom_call.1']
  %s0 = inlined_call_operand.hbm [shape: f32[2,1,16,16], index: 0, kind: input, shape index: {}]
  %s1 = inlined_call_operand.hbm [shape: f32[3,3,1,64], index: 1, kind: input, shape index: {}]
  %s2 = inlined_call_operand.vmem [shape: f32[1,64], index: 2, kind: input, shape index: {}]
  %s3 = inlined_call_operand.vmem [shape: f32[1,64], index: 3, kind: input, shape index: {}]
  %s4 = inlined_call_operand.<no memory space> [shape: f32[1], index: 4, kind: input, shape index: {}]
  %s5 = inlined_call_operand.hbm [shape: f32[2,8,8,64], index: 5, kind: output, shape index: {}]
  %s6 = sld [smem:[#allocation0]]
  $region61: #{tpu_custom_call.1} parent=0
    _
  %s8 = ssub.s32 1, %s6
  %s9 = scalar_select 0, %s8, %s6
  %10 = sst [smem:[#allocation3]] %s4
  $region1: #{tpu_custom_call.1} parent=0
    #allocation4 [shape = 'u8[16384]{0}', space=vmem, size = 0x4000, scoped, tag = 'input window, operand 0']
    #allocation5 [shape = 's32[2]{0}', space=sflag, size = 0x8, scoped, tag = 'scoped memory for tpu_custom_call.1']
    #allocation6 [shape = 's32[2]{0}', space=sflag, size = 0x8, scoped, tag = 'scoped memory for tpu_custom_call.1']
    #allocation7 [shape = 'u8[4608]{0}', space=vmem, size = 0x1400, scoped, tag = 'input window, operand 1, single buffered']
    #allocation8 [shape = 's32[1]{0}', space=sflag, size = 0x4, scoped, tag = 'scoped memory for tpu_custom_call.1']
    #allocation9 [shape = 'u8[65536]{0}', space=vmem, size = 0x10000, scoped, tag = 'output window, operand 0']
    %11 = vsyncpa [#allocation5], 0
    %s12 = scalar_lea.sflag [#allocation5], 1
    %13 = vsyncpa %s12, 0
    %14 = vsyncpa [#allocation8], 0
    %15 = vsyncpa [#allocation6], 0
    %s16 = scalar_lea.sflag [#allocation6], 1
    %17 = vsyncpa %s16, 0
    loop: start=0, step=1, limit=4
    $region2: #{tpu_custom_call.1} parent=1 // loop_pre_header
      _
    $region3: #{tpu_custom_call.1} parent=1 // loop_header
      %s19 = sphi 0, %s23
      %p20 = scmp.ge.s32.totalorder %s19, 4
      %s29 = sphi 0, %s31
      %s32 = sphi 0, %s29
      %s33 = sphi 0, %s32
      %s49 = sphi 0, %s33
      %s53 = sphi 0, %s53
      %s55 = sphi 0, %s53
      %s56 = sphi 0, %s55
      %s70 = sphi 0, %s56
      %s74 = sphi 0, %s74
      %s76 = sphi 0, %s74
      %s77 = sphi 0, %s76
      %s91 = sphi 0, %s77
      %s95 = sphi 0, %s95
      %s97 = sphi 0, %s95
      %s98 = sphi 0, %s97
      %s112 = sphi 0, %s98
      %s116 = sphi 0, %s116
      %s118 = sphi 0, %s116
      %s119 = sphi 0, %s118
      %s133 = sphi 0, %s119
      %s139 = sphi 0, %s141
      %s142 = sphi 0, %s139
      %s143 = sphi 0, %s142
      %s159 = sphi 0, %s143
    $region4: #{tpu_custom_call.1} parent=1 // loop_header_branch
      %22 = sbr.rel (%p20) target = $region8
    $region5: #{tpu_custom_call.1} parent=1 // loop_body
      %s24 = ssub.s32 %s19, 1
      %s25 = ssub.s32 %s19, 2
      %s26 = sadd.s32 %s19, 1
      %s27 = ssub.s32 %s19, %s26
      %p28 = scmp.eq.s32.totalorder %s27, 0
      %s30 = sadd.s32 %s29, 1
      %s31 = scalar_select %p28, %s29, %s30
      %p34 = pneg %p28
      %p35 = scmp.eq.s32.totalorder %s19, 1
      %p36 = por %p34, %p35
      %p37 = scmp.ne.s32.totalorder %s29, %s32
      %p38 = scmp.eq.s32.totalorder %s19, 0
      %p39 = por %p37, %p38
      %p40 = scmp.ne.s32.totalorder %s29, %s32
      %p41 = scmp.eq.s32.totalorder %s24, 1
      %p42 = por %p40, %p41
      %p43 = scmp.ne.s32.totalorder %s32, %s33
      %p44 = scmp.eq.s32.totalorder %s24, 0
      %p45 = por %p43, %p44
      %p46 = scmp.ne.s32.totalorder %s32, %s33
      %p47 = scmp.eq.s32.totalorder %s25, 1
      %p48 = por %p46, %p47
      %p50 = scmp.ne.s32.totalorder %s33, %s49
      %p51 = scmp.eq.s32.totalorder %s25, 0
      %p52 = por %p50, %p51
      %s54 = sadd.s32 %s53, 1
      %p57 = scmp.eq.s32.totalorder %s19, 1
      %p58 = scmp.ne.s32.totalorder %s53, %s55
      %p59 = scmp.eq.s32.totalorder %s19, 0
      %p60 = por %p58, %p59
      %p61 = scmp.ne.s32.totalorder %s53, %s55
      %p62 = scmp.eq.s32.totalorder %s24, 1
      %p63 = por %p61, %p62
      %p64 = scmp.ne.s32.totalorder %s55, %s56
      %p65 = scmp.eq.s32.totalorder %s24, 0
      %p66 = por %p64, %p65
      %p67 = scmp.ne.s32.totalorder %s55, %s56
      %p68 = scmp.eq.s32.totalorder %s25, 1
      %p69 = por %p67, %p68
      %p71 = scmp.ne.s32.totalorder %s56, %s70
      %p72 = scmp.eq.s32.totalorder %s25, 0
      %p73 = por %p71, %p72
      %s75 = sadd.s32 %s74, 1
      %p78 = scmp.eq.s32.totalorder %s19, 1
      %p79 = scmp.ne.s32.totalorder %s74, %s76
      %p80 = scmp.eq.s32.totalorder %s19, 0
      %p81 = por %p79, %p80
      %p82 = scmp.ne.s32.totalorder %s74, %s76
      %p83 = scmp.eq.s32.totalorder %s24, 1
      %p84 = por %p82, %p83
      %p85 = scmp.ne.s32.totalorder %s76, %s77
      %p86 = scmp.eq.s32.totalorder %s24, 0
      %p87 = por %p85, %p86
      %p88 = scmp.ne.s32.totalorder %s76, %s77
      %p89 = scmp.eq.s32.totalorder %s25, 1
      %p90 = por %p88, %p89
      %p92 = scmp.ne.s32.totalorder %s77, %s91
      %p93 = scmp.eq.s32.totalorder %s25, 0
      %p94 = por %p92, %p93
      %s96 = sadd.s32 %s95, 1
      %p99 = scmp.eq.s32.totalorder %s19, 1
      %p100 = scmp.ne.s32.totalorder %s95, %s97
      %p101 = scmp.eq.s32.totalorder %s19, 0
      %p102 = por %p100, %p101
      %p103 = scmp.ne.s32.totalorder %s95, %s97
      %p104 = scmp.eq.s32.totalorder %s24, 1
      %p105 = por %p103, %p104
      %p106 = scmp.ne.s32.totalorder %s97, %s98
      %p107 = scmp.eq.s32.totalorder %s24, 0
      %p108 = por %p106, %p107
      %p109 = scmp.ne.s32.totalorder %s97, %s98
      %p110 = scmp.eq.s32.totalorder %s25, 1
      %p111 = por %p109, %p110
      %p113 = scmp.ne.s32.totalorder %s98, %s112
      %p114 = scmp.eq.s32.totalorder %s25, 0
      %p115 = por %p113, %p114
      %s117 = sadd.s32 %s116, 1
      %p120 = scmp.eq.s32.totalorder %s19, 1
      %p121 = scmp.ne.s32.totalorder %s116, %s118
      %p122 = scmp.eq.s32.totalorder %s19, 0
      %p123 = por %p121, %p122
      %p124 = scmp.ne.s32.totalorder %s116, %s118
      %p125 = scmp.eq.s32.totalorder %s24, 1
      %p126 = por %p124, %p125
      %p127 = scmp.ne.s32.totalorder %s118, %s119
      %p128 = scmp.eq.s32.totalorder %s24, 0
      %p129 = por %p127, %p128
      %p130 = scmp.ne.s32.totalorder %s118, %s119
      %p131 = scmp.eq.s32.totalorder %s25, 1
      %p132 = por %p130, %p131
      %p134 = scmp.ne.s32.totalorder %s119, %s133
      %p135 = scmp.eq.s32.totalorder %s25, 0
      %p136 = por %p134, %p135
      %s137 = ssub.s32 %s19, %s26
      %p138 = scmp.eq.s32.totalorder %s137, 0
      %s140 = sadd.s32 %s139, 1
      %s141 = scalar_select %p138, %s139, %s140
      %p144 = pneg %p138
      %p145 = scmp.eq.s32.totalorder %s19, 1
      %p146 = por %p144, %p145
      %p147 = scmp.ne.s32.totalorder %s139, %s142
      %p148 = scmp.eq.s32.totalorder %s19, 0
      %p149 = por %p147, %p148
      %p150 = scmp.ne.s32.totalorder %s139, %s142
      %p151 = scmp.eq.s32.totalorder %s24, 1
      %p152 = por %p150, %p151
      %p153 = scmp.ne.s32.totalorder %s142, %s143
      %p154 = scmp.eq.s32.totalorder %s24, 0
      %p155 = por %p153, %p154
      %p156 = scmp.ne.s32.totalorder %s142, %s143
      %p157 = scmp.eq.s32.totalorder %s25, 1
      %p158 = por %p156, %p157
      %p160 = scmp.ne.s32.totalorder %s143, %s159
      %p161 = scmp.eq.s32.totalorder %s25, 0
      %p162 = por %p160, %p161
      %p163 = scmp.le.s32.totalorder 1, %s19
      %p164 = scmp.lt.s32.totalorder %s19, 3
      %p165 = pnand %p163, %p164
      %p166 = pneg %p165
      // Predicated region
      $region9: #{tpu_custom_call.1} parent=5 // pred_check
        _
      $region10: #{tpu_custom_call.1} parent=5 // pred_check_branch
        %168 = sbr.rel (%p165) target = $region12
      $region11: #{tpu_custom_call.1} parent=5 // pred_region
        %s169 = ssub.s32 %s19, 1
        // Predicated region
        $region13: #{tpu_custom_call.1} parent=11 // pred_check
          %p170 = pneg %p66
        $region14: #{tpu_custom_call.1} parent=11 // pred_check_branch
          %172 = sbr.rel (%p170) target = $region16
        $region15: #{tpu_custom_call.1} parent=11 // pred_region
          %s174 = ssub.s32 144, 144
          %175 = vsyncadd [#allocation8], %s174
          %s176 = sshll.u32 [#allocation7], 4
          %s177 = int_to_ptr.vmem [resolvable:$true] %s176
          %182 = dma.hbm_to_vmem [thread:$0]  %s1, 144, %s177, [#allocation8], 16, 16, 1
        $region16: #{tpu_custom_call.1} parent=11 // pred_fallthru
          _
        // Predicated region
        $region17: #{tpu_custom_call.1} parent=11 // pred_check
          %p183 = pneg %p87
        $region18: #{tpu_custom_call.1} parent=11 // pred_check_branch
          %185 = sbr.rel (%p183) target = $region20
        $region19: #{tpu_custom_call.1} parent=11 // pred_region
          _
        $region20: #{tpu_custom_call.1} parent=11 // pred_fallthru
          _
        // Predicated region
        $region21: #{tpu_custom_call.1} parent=11 // pred_check
          %p186 = pneg %p108
        $region22: #{tpu_custom_call.1} parent=11 // pred_check_branch
          %188 = sbr.rel (%p186) target = $region24
        $region23: #{tpu_custom_call.1} parent=11 // pred_region
          _
        $region24: #{tpu_custom_call.1} parent=11 // pred_fallthru
          _
        // Predicated region
        $region25: #{tpu_custom_call.1} parent=11 // pred_check
          %p189 = pneg %p129
        $region26: #{tpu_custom_call.1} parent=11 // pred_check_branch
          %191 = sbr.rel (%p189) target = $region28
        $region27: #{tpu_custom_call.1} parent=11 // pred_region
          _
        $region28: #{tpu_custom_call.1} parent=11 // pred_fallthru
          _
      $region12: #{tpu_custom_call.1} parent=5 // pred_fallthru
        _
      %p192 = scmp.lt.s32.totalorder %s19, 2
      // Predicated region
      $region29: #{tpu_custom_call.1} parent=5 // pred_check
        %p193 = pneg %p192
      $region30: #{tpu_custom_call.1} parent=5 // pred_check_branch
        %195 = sbr.rel (%p193) target = $region32
      $region31: #{tpu_custom_call.1} parent=5 // pred_region
        // Predicated region
        $region33: #{tpu_custom_call.1} parent=31 // pred_check
          %p196 = pneg %p39
        $region34: #{tpu_custom_call.1} parent=31 // pred_check_branch
          %198 = sbr.rel (%p196) target = $region36
        $region35: #{tpu_custom_call.1} parent=31 // pred_region
          %s199 = sand.u32 %s29, 1
          %s200 = scalar_lea.sflag [#allocation5], %s199
          %s201 = sand.u32 %s29, 1
          %s202 = smul.addr %s201, 16
          %s203 = scalar_lea.vmem [#allocation4], %s202
          %s205 = ssub.s32 256, 256
          %206 = vsyncadd %s200, %s205
          %s207 = smul.addr %s19, 2
          %s208 = smul.addr %s207, 128
          %s209 = scalar_lea.hbm %s0, %s208
          %s210 = sshll.u32 %s203, 4
          %s211 = int_to_ptr.vmem [resolvable:$true] %s210
          %216 = dma.hbm_to_vmem [thread:$0]  %s209, 256, %s211, %s200, 128, 128, 8
        $region36: #{tpu_custom_call.1} parent=31 // pred_fallthru
          _
      $region32: #{tpu_custom_call.1} parent=5 // pred_fallthru
        _
      %p217 = scmp.le.s32.totalorder 1, %s19
      %p218 = scmp.lt.s32.totalorder %s19, 3
      %p219 = pnand %p217, %p218
      %p220 = pneg %p219
      // Predicated region
      $region37: #{tpu_custom_call.1} parent=5 // pred_check
        _
      $region38: #{tpu_custom_call.1} parent=5 // pred_check_branch
        %222 = sbr.rel (%p219) target = $region40
      $region39: #{tpu_custom_call.1} parent=5 // pred_region
        %s223 = ssub.s32 %s19, 1
        %s224 = sand.u32 %s32, 1
        %s225 = scalar_lea.sflag [#allocation5], %s224
        %s226 = sand.u32 %s32, 1
        %s227 = smul.addr %s226, 16
        %s228 = scalar_lea.vmem [#allocation4], %s227
        // Predicated region
        $region41: #{tpu_custom_call.1} parent=39 // pred_check
          %p229 = pneg %p45
        $region42: #{tpu_custom_call.1} parent=39 // pred_check_branch
          %231 = sbr.rel (%p229) target = $region44
        $region43: #{tpu_custom_call.1} parent=39 // pred_region
          %232 = dma.done %s225, 256
        $region44: #{tpu_custom_call.1} parent=39 // pred_fallthru
          _
        // Predicated region
        $region45: #{tpu_custom_call.1} parent=39 // pred_check
          %p233 = pneg %p66
        $region46: #{tpu_custom_call.1} parent=39 // pred_check_branch
          %235 = sbr.rel (%p233) target = $region48
        $region47: #{tpu_custom_call.1} parent=39 // pred_region
          %236 = dma.done [#allocation8], 144
        $region48: #{tpu_custom_call.1} parent=39 // pred_fallthru
          _
        %s237 = sand.u32 %s32, 1
        %s238 = scalar_lea.sflag [#allocation5], %s237
        %s239 = sand.u32 %s32, 1
        %s240 = smul.addr %s239, 16
        %s241 = scalar_lea.vmem [#allocation4], %s240
        %p242 = pneg %p45
        %p243 = pneg %p42
        %p244 = pneg %p66
        %p245 = pneg %p63
        %p246 = pneg %p87
        %p247 = pneg %p84
        %p248 = pneg %p108
        %p249 = pneg %p105
        %p250 = pneg %p129
        %p251 = pneg %p126
        %p252 = pneg %p155
        %p253 = pneg %p152
        %s254 = sand.u32 %s142, 1
        %s255 = scalar_lea.sflag [#allocation6], %s254
        %s256 = sand.u32 %s142, 1
        %s257 = smul.addr %s256, 64
        %s258 = scalar_lea.vmem [#allocation9], %s257
        %s259 = sld [smem:[#allocation3]]
        %v260 = vstv %s259
        %v261 = vrcp.pop %v260
        %s262 = vtos %v261
        %vm263 = vcmask 146432
        %264 = vst.msk [vmem:[#allocation2] sm:$0xff] %vm263, 0.0
        %265 = vst.msk [vmem:[#allocation2 + $0x8] sm:$0xff] %vm263, 0.0
        %vm266 = vcmask 140288
        %267 = vst.msk [vmem:[#allocation2 + $0x10] sm:$0x3] %vm266, 0.0
        %v268 = vld [vmem:[%s228] sm:$0xff]
        %v269 = vld [vmem:[%s228 + $0x8] sm:$0xff]
        %272 = vrot.lane.b32.xlu0 %v268, 1
        %v273 = vpop.permute.xlu0 %272
        %274 = vrot.lane.b32.xlu0 %v269, 1
        %v275 = vpop.permute.xlu0 %274
        %vm278 = vcmask 138248
        %279 = vst.msk [vmem:[#allocation2 + $0x1] sm:$0xff] %vm278, %v273
        %280 = vst.msk [vmem:[#allocation2 + $0x9] sm:$0xff] %vm278, %v275
        %v281 = vld [vmem:[#allocation2] sm:$0xff]
        %v282 = vld [vmem:[#allocation2 + $0x8] sm:$0xff]
        %v283 = vld [vmem:[#allocation2 + $0x10] sm:$0x3]
        %v284 = vlaneseq
        %v285 = vshrl.u32 %v284, 7
        %v286 = vsub.s32 0, %v285
        %v287 = vrot.slane %v281, %v286
        %289 = vbcast.lane.b32.xlu0 %v287, 256
        %v290 = vpop.permute.xlu0 %289
        %s292 = sor.u32 256, 8
        %293 = vbcast.lane.b32.xlu0 %v287, %s292
        %v294 = vpop.permute.xlu0 %293
        %v295 = vlaneseq
        %v296 = vshrl.u32 %v295, 7
        %v297 = vsub.s32 1, %v296
        %v298 = vrot.slane %v281, %v297
        %300 = vbcast.lane.b32.xlu0 %v298, 256
        %v301 = vpop.permute.xlu0 %300
        %s303 = sor.u32 256, 8
        %304 = vbcast.lane.b32.xlu0 %v298, %s303
        %v305 = vpop.permute.xlu0 %304
        %v306 = vlaneseq
        %v307 = vshrl.u32 %v306, 7
        %v308 = vsub.s32 2, %v307
        %v309 = vrot.slane %v281, %v308
        %311 = vbcast.lane.b32.xlu0 %v309, 256
        %v312 = vpop.permute.xlu0 %311
        %s314 = sor.u32 256, 8
        %315 = vbcast.lane.b32.xlu0 %v309, %s314
        %v316 = vpop.permute.xlu0 %315
        %v317 = vlaneseq
        %v318 = vshrl.u32 %v317, 7
        %v319 = vsub.s32 3, %v318
        %v320 = vrot.slane %v281, %v319
        %322 = vbcast.lane.b32.xlu0 %v320, 256
        %v323 = vpop.permute.xlu0 %322
        %s325 = sor.u32 256, 8
        %326 = vbcast.lane.b32.xlu0 %v320, %s325
        %v327 = vpop.permute.xlu0 %326
        %v328 = vlaneseq
        %v329 = vshrl.u32 %v328, 7
        %v330 = vsub.s32 4, %v329
        %v331 = vrot.slane %v281, %v330
        %333 = vbcast.lane.b32.xlu0 %v331, 256
        %v334 = vpop.permute.xlu0 %333
        %s336 = sor.u32 256, 8
        %337 = vbcast.lane.b32.xlu0 %v331, %s336
        %v338 = vpop.permute.xlu0 %337
        %v339 = vlaneseq
        %v340 = vshrl.u32 %v339, 7
        %v341 = vsub.s32 5, %v340
        %v342 = vrot.slane %v281, %v341
        %344 = vbcast.lane.b32.xlu0 %v342, 256
        %v345 = vpop.permute.xlu0 %344
        %s347 = sor.u32 256, 8
        %348 = vbcast.lane.b32.xlu0 %v342, %s347
        %v349 = vpop.permute.xlu0 %348
        %v350 = vlaneseq
        %v351 = vshrl.u32 %v350, 7
        %v352 = vsub.s32 6, %v351
        %v353 = vrot.slane %v281, %v352
        %355 = vbcast.lane.b32.xlu0 %v353, 256
        %v356 = vpop.permute.xlu0 %355
        %s358 = sor.u32 256, 8
        %359 = vbcast.lane.b32.xlu0 %v353, %s358
        %v360 = vpop.permute.xlu0 %359
        %v361 = vlaneseq
        %v362 = vshrl.u32 %v361, 7
        %v363 = vsub.s32 7, %v362
        %v364 = vrot.slane %v281, %v363
        %366 = vbcast.lane.b32.xlu0 %v364, 256
        %v367 = vpop.permute.xlu0 %366
        %s369 = sor.u32 256, 8
        %370 = vbcast.lane.b32.xlu0 %v364, %s369
        %v371 = vpop.permute.xlu0 %370
        %v372 = vlaneseq
        %v373 = vshrl.u32 %v372, 7
        %v374 = vsub.s32 0, %v373
        %v375 = vrot.slane %v282, %v374
        %377 = vbcast.lane.b32.xlu0 %v375, 256
        %v378 = vpop.permute.xlu0 %377
        %s380 = sor.u32 256, 8
        %381 = vbcast.lane.b32.xlu0 %v375, %s380
        %v382 = vpop.permute.xlu0 %381
        %v383 = vlaneseq
        %v384 = vshrl.u32 %v383, 7
        %v385 = vsub.s32 1, %v384
        %v386 = vrot.slane %v282, %v385
        %388 = vbcast.lane.b32.xlu0 %v386, 256
        %v389 = vpop.permute.xlu0 %388
        %s391 = sor.u32 256, 8
        %392 = vbcast.lane.b32.xlu0 %v386, %s391
        %v393 = vpop.permute.xlu0 %392
        %v394 = vlaneseq
        %v395 = vshrl.u32 %v394, 7
        %v396 = vsub.s32 2, %v395
        %v397 = vrot.slane %v282, %v396
        %399 = vbcast.lane.b32.xlu0 %v397, 256
        %v400 = vpop.permute.xlu0 %399
        %s402 = sor.u32 256, 8
        %403 = vbcast.lane.b32.xlu0 %v397, %s402
        %v404 = vpop.permute.xlu0 %403
        %v405 = vlaneseq
        %v406 = vshrl.u32 %v405, 7
        %v407 = vsub.s32 3, %v406
        %v408 = vrot.slane %v282, %v407
        %410 = vbcast.lane.b32.xlu0 %v408, 256
        %v411 = vpop.permute.xlu0 %410
        %s413 = sor.u32 256, 8
        %414 = vbcast.lane.b32.xlu0 %v408, %s413
        %v415 = vpop.permute.xlu0 %414
        %v416 = vlaneseq
        %v417 = vshrl.u32 %v416, 7
        %v418 = vsub.s32 4, %v417
        %v419 = vrot.slane %v282, %v418
        %421 = vbcast.lane.b32.xlu0 %v419, 256
        %v422 = vpop.permute.xlu0 %421
        %s424 = sor.u32 256, 8
        %425 = vbcast.lane.b32.xlu0 %v419, %s424
        %v426 = vpop.permute.xlu0 %425
        %v427 = vlaneseq
        %v428 = vshrl.u32 %v427, 7
        %v429 = vsub.s32 5, %v428
        %v430 = vrot.slane %v282, %v429
        %432 = vbcast.lane.b32.xlu0 %v430, 256
        %v433 = vpop.permute.xlu0 %432
        %s435 = sor.u32 256, 8
        %436 = vbcast.lane.b32.xlu0 %v430, %s435
        %v437 = vpop.permute.xlu0 %436
        %v438 = vlaneseq
        %v439 = vshrl.u32 %v438, 7
        %v440 = vsub.s32 6, %v439
        %v441 = vrot.slane %v282, %v440
        %443 = vbcast.lane.b32.xlu0 %v441, 256
        %v444 = vpop.permute.xlu0 %443
        %s446 = sor.u32 256, 8
        %447 = vbcast.lane.b32.xlu0 %v441, %s446
        %v448 = vpop.permute.xlu0 %447
        %v449 = vlaneseq
        %v450 = vshrl.u32 %v449, 7
        %v451 = vsub.s32 7, %v450
        %v452 = vrot.slane %v282, %v451
        %454 = vbcast.lane.b32.xlu0 %v452, 256
        %v455 = vpop.permute.xlu0 %454
        %s457 = sor.u32 256, 8
        %458 = vbcast.lane.b32.xlu0 %v452, %s457
        %v459 = vpop.permute.xlu0 %458
        %v460 = vlaneseq
        %v461 = vshrl.u32 %v460, 7
        %v462 = vsub.s32 0, %v461
        %v463 = vrot.slane %v283, %v462
        %465 = vbcast.lane.b32.xlu0 %v463, 256
        %v466 = vpop.permute.xlu0 %465
        %s468 = sor.u32 256, 8
        %469 = vbcast.lane.b32.xlu0 %v463, %s468
        %v470 = vpop.permute.xlu0 %469
        %v471 = vlaneseq
        %v472 = vshrl.u32 %v471, 7
        %v473 = vsub.s32 1, %v472
        %v474 = vrot.slane %v283, %v473
        %476 = vbcast.lane.b32.xlu0 %v474, 256
        %v477 = vpop.permute.xlu0 %476
        %s479 = sor.u32 256, 8
        %480 = vbcast.lane.b32.xlu0 %v474, %s479
        %v481 = vpop.permute.xlu0 %480
        %v482 = vld [vmem:[#allocation7] sm:$0x1]
        %v484 = vlaneseq
        %v485 = vshrl.u32 %v484, 7
        %v486 = vsub.s32 0, %v485
        %v487 = vrot.slane %v482, %v486
        %v489 = vmul.f32 %v290, %v487
        %v490 = vmul.f32 %v294, %v487
        %v491 = vmul.f32 %v301, %v487
        %v492 = vmul.f32 %v305, %v487
        %v493 = vmul.f32 %v312, %v487
        %v494 = vmul.f32 %v316, %v487
        %v495 = vmul.f32 %v323, %v487
        %v496 = vmul.f32 %v327, %v487
        %v497 = vmul.f32 %v334, %v487
        %v498 = vmul.f32 %v338, %v487
        %v499 = vmul.f32 %v345, %v487
        %v500 = vmul.f32 %v349, %v487
        %v501 = vmul.f32 %v356, %v487
        %v502 = vmul.f32 %v360, %v487
        %v503 = vmul.f32 %v367, %v487
        %v504 = vmul.f32 %v371, %v487
        %v505 = vmul.f32 %v378, %v487
        %v506 = vmul.f32 %v382, %v487
        %v507 = vmul.f32 %v389, %v487
        %v508 = vmul.f32 %v393, %v487
        %v509 = vmul.f32 %v400, %v487
        %v510 = vmul.f32 %v404, %v487
        %v511 = vmul.f32 %v411, %v487
        %v512 = vmul.f32 %v415, %v487
        %v513 = vmul.f32 %v422, %v487
        %v514 = vmul.f32 %v426, %v487
        %v515 = vmul.f32 %v433, %v487
        %v516 = vmul.f32 %v437, %v487
        %v517 = vmul.f32 %v444, %v487
        %v518 = vmul.f32 %v448, %v487
        %v519 = vmul.f32 %v455, %v487
        %v520 = vmul.f32 %v459, %v487
        %v521 = vadd.f32 %v489, 0.0
        %v522 = vadd.f32 %v490, 0.0
        %v523 = vadd.f32 %v491, 0.0
        %v524 = vadd.f32 %v492, 0.0
        %v525 = vadd.f32 %v493, 0.0
        %v526 = vadd.f32 %v494, 0.0
        %v527 = vadd.f32 %v495, 0.0
        %v528 = vadd.f32 %v496, 0.0
        %v529 = vadd.f32 %v497, 0.0
        %v530 = vadd.f32 %v498, 0.0
        %v531 = vadd.f32 %v499, 0.0
        %v532 = vadd.f32 %v500, 0.0
        %v533 = vadd.f32 %v501, 0.0
        %v534 = vadd.f32 %v502, 0.0
        %v535 = vadd.f32 %v503, 0.0
        %v536 = vadd.f32 %v504, 0.0
        %v537 = vadd.f32 %v505, 0.0
        %v538 = vadd.f32 %v506, 0.0
        %v539 = vadd.f32 %v507, 0.0
        %v540 = vadd.f32 %v508, 0.0
        %v541 = vadd.f32 %v509, 0.0
        %v542 = vadd.f32 %v510, 0.0
        %v543 = vadd.f32 %v511, 0.0
        %v544 = vadd.f32 %v512, 0.0
        %v545 = vadd.f32 %v513, 0.0
        %v546 = vadd.f32 %v514, 0.0
        %v547 = vadd.f32 %v515, 0.0
        %v548 = vadd.f32 %v516, 0.0
        %v549 = vadd.f32 %v517, 0.0
        %v550 = vadd.f32 %v518, 0.0
        %v551 = vadd.f32 %v519, 0.0
        %v552 = vadd.f32 %v520, 0.0
        %s553 = scalar_lea.vmem [#allocation7], 3
        %v554 = vld [vmem:[%s553] sm:$0x1]
        %v556 = vlaneseq
        %v557 = vshrl.u32 %v556, 7
        %v558 = vsub.s32 0, %v557
        %v559 = vrot.slane %v554, %v558
        %v561 = vmul.f32 %v301, %v559
        %v562 = vmul.f32 %v305, %v559
        %v563 = vmul.f32 %v312, %v559
        %v564 = vmul.f32 %v316, %v559
        %v565 = vmul.f32 %v323, %v559
        %v566 = vmul.f32 %v327, %v559
        %v567 = vmul.f32 %v334, %v559
        %v568 = vmul.f32 %v338, %v559
        %v569 = vmul.f32 %v345, %v559
        %v570 = vmul.f32 %v349, %v559
        %v571 = vmul.f32 %v356, %v559
        %v572 = vmul.f32 %v360, %v559
        %v573 = vmul.f32 %v367, %v559
        %v574 = vmul.f32 %v371, %v559
        %v575 = vmul.f32 %v378, %v559
        %v576 = vmul.f32 %v382, %v559
        %v577 = vmul.f32 %v389, %v559
        %v578 = vmul.f32 %v393, %v559
        %v579 = vmul.f32 %v400, %v559
        %v580 = vmul.f32 %v404, %v559
        %v581 = vmul.f32 %v411, %v559
        %v582 = vmul.f32 %v415, %v559
        %v583 = vmul.f32 %v422, %v559
        %v584 = vmul.f32 %v426, %v559
        %v585 = vmul.f32 %v433, %v559
        %v586 = vmul.f32 %v437, %v559
        %v587 = vmul.f32 %v444, %v559
        %v588 = vmul.f32 %v448, %v559
        %v589 = vmul.f32 %v455, %v559
        %v590 = vmul.f32 %v459, %v559
        %v591 = vmul.f32 %v466, %v559
        %v592 = vmul.f32 %v470, %v559
        %v593 = vadd.f32 %v521, %v561
        %v594 = vadd.f32 %v522, %v562
        %v595 = vadd.f32 %v523, %v563
        %v596 = vadd.f32 %v524, %v564
        %v597 = vadd.f32 %v525, %v565
        %v598 = vadd.f32 %v526, %v566
        %v599 = vadd.f32 %v527, %v567
        %v600 = vadd.f32 %v528, %v568
        %v601 = vadd.f32 %v529, %v569
        %v602 = vadd.f32 %v530, %v570
        %v603 = vadd.f32 %v531, %v571
        %v604 = vadd.f32 %v532, %v572
        %v605 = vadd.f32 %v533, %v573
        %v606 = vadd.f32 %v534, %v574
        %v607 = vadd.f32 %v535, %v575
        %v608 = vadd.f32 %v536, %v576
        %v609 = vadd.f32 %v537, %v577
        %v610 = vadd.f32 %v538, %v578
        %v611 = vadd.f32 %v539, %v579
        %v612 = vadd.f32 %v540, %v580
        %v613 = vadd.f32 %v541, %v581
        %v614 = vadd.f32 %v542, %v582
        %v615 = vadd.f32 %v543, %v583
        %v616 = vadd.f32 %v544, %v584
        %v617 = vadd.f32 %v545, %v585
        %v618 = vadd.f32 %v546, %v586
        %v619 = vadd.f32 %v547, %v587
        %v620 = vadd.f32 %v548, %v588
        %v621 = vadd.f32 %v549, %v589
        %v622 = vadd.f32 %v550, %v590
        %v623 = vadd.f32 %v551, %v591
        %v624 = vadd.f32 %v552, %v592
        %s625 = scalar_lea.vmem [#allocation7], 6
        %v626 = vld [vmem:[%s625] sm:$0x1]
        %v628 = vlaneseq
        %v629 = vshrl.u32 %v628, 7
        %v630 = vsub.s32 0, %v629
        %v631 = vrot.slane %v626, %v630
        %v633 = vmul.f32 %v312, %v631
        %v634 = vmul.f32 %v316, %v631
        %v635 = vmul.f32 %v323, %v631
        %v636 = vmul.f32 %v327, %v631
        %v637 = vmul.f32 %v334, %v631
        %v638 = vmul.f32 %v338, %v631
        %v639 = vmul.f32 %v345, %v631
        %v640 = vmul.f32 %v349, %v631
        %v641 = vmul.f32 %v356, %v631
        %v642 = vmul.f32 %v360, %v631
        %v643 = vmul.f32 %v367, %v631
        %v644 = vmul.f32 %v371, %v631
        %v645 = vmul.f32 %v378, %v631
        %v646 = vmul.f32 %v382, %v631
        %v647 = vmul.f32 %v389, %v631
        %v648 = vmul.f32 %v393, %v631
        %v649 = vmul.f32 %v400, %v631
        %v650 = vmul.f32 %v404, %v631
        %v651 = vmul.f32 %v411, %v631
        %v652 = vmul.f32 %v415, %v631
        %v653 = vmul.f32 %v422, %v631
        %v654 = vmul.f32 %v426, %v631
        %v655 = vmul.f32 %v433, %v631
        %v656 = vmul.f32 %v437, %v631
        %v657 = vmul.f32 %v444, %v631
        %v658 = vmul.f32 %v448, %v631
        %v659 = vmul.f32 %v455, %v631
        %v660 = vmul.f32 %v459, %v631
        %v661 = vmul.f32 %v466, %v631
        %v662 = vmul.f32 %v470, %v631
        %v663 = vmul.f32 %v477, %v631
        %v664 = vmul.f32 %v481, %v631
        %v665 = vadd.f32 %v593, %v633
        %v666 = vadd.f32 %v594, %v634
        %v667 = vadd.f32 %v595, %v635
        %v668 = vadd.f32 %v596, %v636
        %v669 = vadd.f32 %v597, %v637
        %v670 = vadd.f32 %v598, %v638
        %v671 = vadd.f32 %v599, %v639
        %v672 = vadd.f32 %v600, %v640
        %v673 = vadd.f32 %v601, %v641
        %v674 = vadd.f32 %v602, %v642
        %v675 = vadd.f32 %v603, %v643
        %v676 = vadd.f32 %v604, %v644
        %v677 = vadd.f32 %v605, %v645
        %v678 = vadd.f32 %v606, %v646
        %v679 = vadd.f32 %v607, %v647
        %v680 = vadd.f32 %v608, %v648
        %v681 = vadd.f32 %v609, %v649
        %v682 = vadd.f32 %v610, %v650
        %v683 = vadd.f32 %v611, %v651
        %v684 = vadd.f32 %v612, %v652
        %v685 = vadd.f32 %v613, %v653
        %v686 = vadd.f32 %v614, %v654
        %v687 = vadd.f32 %v615, %v655
        %v688 = vadd.f32 %v616, %v656
        %v689 = vadd.f32 %v617, %v657
        %v690 = vadd.f32 %v618, %v658
        %v691 = vadd.f32 %v619, %v659
        %v692 = vadd.f32 %v620, %v660
        %v693 = vadd.f32 %v621, %v661
        %v694 = vadd.f32 %v622, %v662
        %v695 = vadd.f32 %v623, %v663
        %v696 = vadd.f32 %v624, %v664
        %s698 = sor.u32 256, 1
        %699 = vbcast.lane.b32.xlu0 %v287, %s698
        %v700 = vpop.permute.xlu0 %699
        %s702 = sor.u32 256, 9
        %703 = vbcast.lane.b32.xlu0 %v287, %s702
        %v704 = vpop.permute.xlu0 %703
        %s706 = sor.u32 256, 1
        %707 = vbcast.lane.b32.xlu0 %v298, %s706
        %v708 = vpop.permute.xlu0 %707
        %s710 = sor.u32 256, 9
        %711 = vbcast.lane.b32.xlu0 %v298, %s710
        %v712 = vpop.permute.xlu0 %711
        %s714 = sor.u32 256, 1
        %715 = vbcast.lane.b32.xlu0 %v309, %s714
        %v716 = vpop.permute.xlu0 %715
        %s718 = sor.u32 256, 9
        %719 = vbcast.lane.b32.xlu0 %v309, %s718
        %v720 = vpop.permute.xlu0 %719
        %s722 = sor.u32 256, 1
        %723 = vbcast.lane.b32.xlu0 %v320, %s722
        %v724 = vpop.permute.xlu0 %723
        %s726 = sor.u32 256, 9
        %727 = vbcast.lane.b32.xlu0 %v320, %s726
        %v728 = vpop.permute.xlu0 %727
        %s730 = sor.u32 256, 1
        %731 = vbcast.lane.b32.xlu0 %v331, %s730
        %v732 = vpop.permute.xlu0 %731
        %s734 = sor.u32 256, 9
        %735 = vbcast.lane.b32.xlu0 %v331, %s734
        %v736 = vpop.permute.xlu0 %735
        %s738 = sor.u32 256, 1
        %739 = vbcast.lane.b32.xlu0 %v342, %s738
        %v740 = vpop.permute.xlu0 %739
        %s742 = sor.u32 256, 9
        %743 = vbcast.lane.b32.xlu0 %v342, %s742
        %v744 = vpop.permute.xlu0 %743
        %s746 = sor.u32 256, 1
        %747 = vbcast.lane.b32.xlu0 %v353, %s746
        %v748 = vpop.permute.xlu0 %747
        %s750 = sor.u32 256, 9
        %751 = vbcast.lane.b32.xlu0 %v353, %s750
        %v752 = vpop.permute.xlu0 %751
        %s754 = sor.u32 256, 1
        %755 = vbcast.lane.b32.xlu0 %v364, %s754
        %v756 = vpop.permute.xlu0 %755
        %s758 = sor.u32 256, 9
        %759 = vbcast.lane.b32.xlu0 %v364, %s758
        %v760 = vpop.permute.xlu0 %759
        %s762 = sor.u32 256, 1
        %763 = vbcast.lane.b32.xlu0 %v375, %s762
        %v764 = vpop.permute.xlu0 %763
        %s766 = sor.u32 256, 9
        %767 = vbcast.lane.b32.xlu0 %v375, %s766
        %v768 = vpop.permute.xlu0 %767
        %s770 = sor.u32 256, 1
        %771 = vbcast.lane.b32.xlu0 %v386, %s770
        %v772 = vpop.permute.xlu0 %771
        %s774 = sor.u32 256, 9
        %775 = vbcast.lane.b32.xlu0 %v386, %s774
        %v776 = vpop.permute.xlu0 %775
        %s778 = sor.u32 256, 1
        %779 = vbcast.lane.b32.xlu0 %v397, %s778
        %v780 = vpop.permute.xlu0 %779
        %s782 = sor.u32 256, 9
        %783 = vbcast.lane.b32.xlu0 %v397, %s782
        %v784 = vpop.permute.xlu0 %783
        %s786 = sor.u32 256, 1
        %787 = vbcast.lane.b32.xlu0 %v408, %s786
        %v788 = vpop.permute.xlu0 %787
        %s790 = sor.u32 256, 9
        %791 = vbcast.lane.b32.xlu0 %v408, %s790
        %v792 = vpop.permute.xlu0 %791
        %s794 = sor.u32 256, 1
        %795 = vbcast.lane.b32.xlu0 %v419, %s794
        %v796 = vpop.permute.xlu0 %795
        %s798 = sor.u32 256, 9
        %799 = vbcast.lane.b32.xlu0 %v419, %s798
        %v800 = vpop.permute.xlu0 %799
        %s802 = sor.u32 256, 1
        %803 = vbcast.lane.b32.xlu0 %v430, %s802
        %v804 = vpop.permute.xlu0 %803
        %s806 = sor.u32 256, 9
        %807 = vbcast.lane.b32.xlu0 %v430, %s806
        %v808 = vpop.permute.xlu0 %807
        %s810 = sor.u32 256, 1
        %811 = vbcast.lane.b32.xlu0 %v441, %s810
        %v812 = vpop.permute.xlu0 %811
        %s814 = sor.u32 256, 9
        %815 = vbcast.lane.b32.xlu0 %v441, %s814
        %v816 = vpop.permute.xlu0 %815
        %s818 = sor.u32 256, 1
        %819 = vbcast.lane.b32.xlu0 %v452, %s818
        %v820 = vpop.permute.xlu0 %819
        %s822 = sor.u32 256, 9
        %823 = vbcast.lane.b32.xlu0 %v452, %s822
        %v824 = vpop.permute.xlu0 %823
        %s826 = sor.u32 256, 1
        %827 = vbcast.lane.b32.xlu0 %v463, %s826
        %v828 = vpop.permute.xlu0 %827
        %s830 = sor.u32 256, 9
        %831 = vbcast.lane.b32.xlu0 %v463, %s830
        %v832 = vpop.permute.xlu0 %831
        %s834 = sor.u32 256, 1
        %835 = vbcast.lane.b32.xlu0 %v474, %s834
        %v836 = vpop.permute.xlu0 %835
        %s838 = sor.u32 256, 9
        %839 = vbcast.lane.b32.xlu0 %v474, %s838
        %v840 = vpop.permute.xlu0 %839
        %s841 = scalar_lea.vmem [#allocation7], 1
        %v842 = vld [vmem:[%s841] sm:$0x1]
        %v844 = vlaneseq
        %v845 = vshrl.u32 %v844, 7
        %v846 = vsub.s32 0, %v845
        %v847 = vrot.slane %v842, %v846
        %v849 = vmul.f32 %v700, %v847
        %v850 = vmul.f32 %v704, %v847
        %v851 = vmul.f32 %v708, %v847
        %v852 = vmul.f32 %v712, %v847
        %v853 = vmul.f32 %v716, %v847
        %v854 = vmul.f32 %v720, %v847
        %v855 = vmul.f32 %v724, %v847
        %v856 = vmul.f32 %v728, %v847
        %v857 = vmul.f32 %v732, %v847
        %v858 = vmul.f32 %v736, %v847
        %v859 = vmul.f32 %v740, %v847
        %v860 = vmul.f32 %v744, %v847
        %v861 = vmul.f32 %v748, %v847
        %v862 = vmul.f32 %v752, %v847
        %v863 = vmul.f32 %v756, %v847
        %v864 = vmul.f32 %v760, %v847
        %v865 = vmul.f32 %v764, %v847
        %v866 = vmul.f32 %v768, %v847
        %v867 = vmul.f32 %v772, %v847
        %v868 = vmul.f32 %v776, %v847
        %v869 = vmul.f32 %v780, %v847
        %v870 = vmul.f32 %v784, %v847
        %v871 = vmul.f32 %v788, %v847
        %v872 = vmul.f32 %v792, %v847
        %v873 = vmul.f32 %v796, %v847
        %v874 = vmul.f32 %v800, %v847
        %v875 = vmul.f32 %v804, %v847
        %v876 = vmul.f32 %v808, %v847
        %v877 = vmul.f32 %v812, %v847
        %v878 = vmul.f32 %v816, %v847
        %v879 = vmul.f32 %v820, %v847
        %v880 = vmul.f32 %v824, %v847
        %v881 = vadd.f32 %v665, %v849
        %v882 = vadd.f32 %v666, %v850
        %v883 = vadd.f32 %v667, %v851
        %v884 = vadd.f32 %v668, %v852
        %v885 = vadd.f32 %v669, %v853
        %v886 = vadd.f32 %v670, %v854
        %v887 = vadd.f32 %v671, %v855
        %v888 = vadd.f32 %v672, %v856
        %v889 = vadd.f32 %v673, %v857
        %v890 = vadd.f32 %v674, %v858
        %v891 = vadd.f32 %v675, %v859
        %v892 = vadd.f32 %v676, %v860
        %v893 = vadd.f32 %v677, %v861
        %v894 = vadd.f32 %v678, %v862
        %v895 = vadd.f32 %v679, %v863
        %v896 = vadd.f32 %v680, %v864
        %v897 = vadd.f32 %v681, %v865
        %v898 = vadd.f32 %v682, %v866
        %v899 = vadd.f32 %v683, %v867
        %v900 = vadd.f32 %v684, %v868
        %v901 = vadd.f32 %v685, %v869
        %v902 = vadd.f32 %v686, %v870
        %v903 = vadd.f32 %v687, %v871
        %v904 = vadd.f32 %v688, %v872
        %v905 = vadd.f32 %v689, %v873
        %v906 = vadd.f32 %v690, %v874
        %v907 = vadd.f32 %v691, %v875
        %v908 = vadd.f32 %v692, %v876
        %v909 = vadd.f32 %v693, %v877
        %v910 = vadd.f32 %v694, %v878
        %v911 = vadd.f32 %v695, %v879
        %v912 = vadd.f32 %v696, %v880
        %s913 = scalar_lea.vmem [#allocation7], 4
        %v914 = vld [vmem:[%s913] sm:$0x1]
        %v916 = vlaneseq
        %v917 = vshrl.u32 %v916, 7
        %v918 = vsub.s32 0, %v917
        %v919 = vrot.slane %v914, %v918
        %v921 = vmul.f32 %v708, %v919
        %v922 = vmul.f32 %v712, %v919
        %v923 = vmul.f32 %v716, %v919
        %v924 = vmul.f32 %v720, %v919
        %v925 = vmul.f32 %v724, %v919
        %v926 = vmul.f32 %v728, %v919
        %v927 = vmul.f32 %v732, %v919
        %v928 = vmul.f32 %v736, %v919
        %v929 = vmul.f32 %v740, %v919
        %v930 = vmul.f32 %v744, %v919
        %v931 = vmul.f32 %v748, %v919
        %v932 = vmul.f32 %v752, %v919
        %v933 = vmul.f32 %v756, %v919
        %v934 = vmul.f32 %v760, %v919
        %v935 = vmul.f32 %v764, %v919
        %v936 = vmul.f32 %v768, %v919
        %v937 = vmul.f32 %v772, %v919
        %v938 = vmul.f32 %v776, %v919
        %v939 = vmul.f32 %v780, %v919
        %v940 = vmul.f32 %v784, %v919
        %v941 = vmul.f32 %v788, %v919
        %v942 = vmul.f32 %v792, %v919
        %v943 = vmul.f32 %v796, %v919
        %v944 = vmul.f32 %v800, %v919
        %v945 = vmul.f32 %v804, %v919
        %v946 = vmul.f32 %v808, %v919
        %v947 = vmul.f32 %v812, %v919
        %v948 = vmul.f32 %v816, %v919
        %v949 = vmul.f32 %v820, %v919
        %v950 = vmul.f32 %v824, %v919
        %v951 = vmul.f32 %v828, %v919
        %v952 = vmul.f32 %v832, %v919
        %v953 = vadd.f32 %v881, %v921
        %v954 = vadd.f32 %v882, %v922
        %v955 = vadd.f32 %v883, %v923
        %v956 = vadd.f32 %v884, %v924
        %v957 = vadd.f32 %v885, %v925
        %v958 = vadd.f32 %v886, %v926
        %v959 = vadd.f32 %v887, %v927
        %v960 = vadd.f32 %v888, %v928
        %v961 = vadd.f32 %v889, %v929
        %v962 = vadd.f32 %v890, %v930
        %v963 = vadd.f32 %v891, %v931
        %v964 = vadd.f32 %v892, %v932
        %v965 = vadd.f32 %v893, %v933
        %v966 = vadd.f32 %v894, %v934
        %v967 = vadd.f32 %v895, %v935
        %v968 = vadd.f32 %v896, %v936
        %v969 = vadd.f32 %v897, %v937
        %v970 = vadd.f32 %v898, %v938
        %v971 = vadd.f32 %v899, %v939
        %v972 = vadd.f32 %v900, %v940
        %v973 = vadd.f32 %v901, %v941
        %v974 = vadd.f32 %v902, %v942
        %v975 = vadd.f32 %v903, %v943
        %v976 = vadd.f32 %v904, %v944
        %v977 = vadd.f32 %v905, %v945
        %v978 = vadd.f32 %v906, %v946
        %v979 = vadd.f32 %v907, %v947
        %v980 = vadd.f32 %v908, %v948
        %v981 = vadd.f32 %v909, %v949
        %v982 = vadd.f32 %v910, %v950
        %v983 = vadd.f32 %v911, %v951
        %v984 = vadd.f32 %v912, %v952
        %s985 = scalar_lea.vmem [#allocation7], 7
        %v986 = vld [vmem:[%s985] sm:$0x1]
        %v988 = vlaneseq
        %v989 = vshrl.u32 %v988, 7
        %v990 = vsub.s32 0, %v989
        %v991 = vrot.slane %v986, %v990
        %v993 = vmul.f32 %v716, %v991
        %v994 = vmul.f32 %v720, %v991
        %v995 = vmul.f32 %v724, %v991
        %v996 = vmul.f32 %v728, %v991
        %v997 = vmul.f32 %v732, %v991
        %v998 = vmul.f32 %v736, %v991
        %v999 = vmul.f32 %v740, %v991
        %v1000 = vmul.f32 %v744, %v991
        %v1001 = vmul.f32 %v748, %v991
        %v1002 = vmul.f32 %v752, %v991
        %v1003 = vmul.f32 %v756, %v991
        %v1004 = vmul.f32 %v760, %v991
        %v1005 = vmul.f32 %v764, %v991
        %v1006 = vmul.f32 %v768, %v991
        %v1007 = vmul.f32 %v772, %v991
        %v1008 = vmul.f32 %v776, %v991
        %v1009 = vmul.f32 %v780, %v991
        %v1010 = vmul.f32 %v784, %v991
        %v1011 = vmul.f32 %v788, %v991
        %v1012 = vmul.f32 %v792, %v991
        %v1013 = vmul.f32 %v796, %v991
        %v1014 = vmul.f32 %v800, %v991
        %v1015 = vmul.f32 %v804, %v991
        %v1016 = vmul.f32 %v808, %v991
        %v1017 = vmul.f32 %v812, %v991
        %v1018 = vmul.f32 %v816, %v991
        %v1019 = vmul.f32 %v820, %v991
        %v1020 = vmul.f32 %v824, %v991
        %v1021 = vmul.f32 %v828, %v991
        %v1022 = vmul.f32 %v832, %v991
        %v1023 = vmul.f32 %v836, %v991
        %v1024 = vmul.f32 %v840, %v991
        %v1025 = vadd.f32 %v953, %v993
        %v1026 = vadd.f32 %v954, %v994
        %v1027 = vadd.f32 %v955, %v995
        %v1028 = vadd.f32 %v956, %v996
        %v1029 = vadd.f32 %v957, %v997
        %v1030 = vadd.f32 %v958, %v998
        %v1031 = vadd.f32 %v959, %v999
        %v1032 = vadd.f32 %v960, %v1000
        %v1033 = vadd.f32 %v961, %v1001
        %v1034 = vadd.f32 %v962, %v1002
        %v1035 = vadd.f32 %v963, %v1003
        %v1036 = vadd.f32 %v964, %v1004
        %v1037 = vadd.f32 %v965, %v1005
        %v1038 = vadd.f32 %v966, %v1006
        %v1039 = vadd.f32 %v967, %v1007
        %v1040 = vadd.f32 %v968, %v1008
        %v1041 = vadd.f32 %v969, %v1009
        %v1042 = vadd.f32 %v970, %v1010
        %v1043 = vadd.f32 %v971, %v1011
        %v1044 = vadd.f32 %v972, %v1012
        %v1045 = vadd.f32 %v973, %v1013
        %v1046 = vadd.f32 %v974, %v1014
        %v1047 = vadd.f32 %v975, %v1015
        %v1048 = vadd.f32 %v976, %v1016
        %v1049 = vadd.f32 %v977, %v1017
        %v1050 = vadd.f32 %v978, %v1018
        %v1051 = vadd.f32 %v979, %v1019
        %v1052 = vadd.f32 %v980, %v1020
        %v1053 = vadd.f32 %v981, %v1021
        %v1054 = vadd.f32 %v982, %v1022
        %v1055 = vadd.f32 %v983, %v1023
        %v1056 = vadd.f32 %v984, %v1024
        %s1058 = sor.u32 256, 2
        %1059 = vbcast.lane.b32.xlu0 %v287, %s1058
        %v1060 = vpop.permute.xlu0 %1059
        %s1062 = sor.u32 256, 10
        %1063 = vbcast.lane.b32.xlu0 %v287, %s1062
        %v1064 = vpop.permute.xlu0 %1063
        %s1066 = sor.u32 256, 2
        %1067 = vbcast.lane.b32.xlu0 %v298, %s1066
        %v1068 = vpop.permute.xlu0 %1067
        %s1070 = sor.u32 256, 10
        %1071 = vbcast.lane.b32.xlu0 %v298, %s1070
        %v1072 = vpop.permute.xlu0 %1071
        %s1074 = sor.u32 256, 2
        %1075 = vbcast.lane.b32.xlu0 %v309, %s1074
        %v1076 = vpop.permute.xlu0 %1075
        %s1078 = sor.u32 256, 10
        %1079 = vbcast.lane.b32.xlu0 %v309, %s1078
        %v1080 = vpop.permute.xlu0 %1079
        %s1082 = sor.u32 256, 2
        %1083 = vbcast.lane.b32.xlu0 %v320, %s1082
        %v1084 = vpop.permute.xlu0 %1083
        %s1086 = sor.u32 256, 10
        %1087 = vbcast.lane.b32.xlu0 %v320, %s1086
        %v1088 = vpop.permute.xlu0 %1087
        %s1090 = sor.u32 256, 2
        %1091 = vbcast.lane.b32.xlu0 %v331, %s1090
        %v1092 = vpop.permute.xlu0 %1091
        %s1094 = sor.u32 256, 10
        %1095 = vbcast.lane.b32.xlu0 %v331, %s1094
        %v1096 = vpop.permute.xlu0 %1095
        %s1098 = sor.u32 256, 2
        %1099 = vbcast.lane.b32.xlu0 %v342, %s1098
        %v1100 = vpop.permute.xlu0 %1099
        %s1102 = sor.u32 256, 10
        %1103 = vbcast.lane.b32.xlu0 %v342, %s1102
        %v1104 = vpop.permute.xlu0 %1103
        %s1106 = sor.u32 256, 2
        %1107 = vbcast.lane.b32.xlu0 %v353, %s1106
        %v1108 = vpop.permute.xlu0 %1107
        %s1110 = sor.u32 256, 10
        %1111 = vbcast.lane.b32.xlu0 %v353, %s1110
        %v1112 = vpop.permute.xlu0 %1111
        %s1114 = sor.u32 256, 2
        %1115 = vbcast.lane.b32.xlu0 %v364, %s1114
        %v1116 = vpop.permute.xlu0 %1115
        %s1118 = sor.u32 256, 10
        %1119 = vbcast.lane.b32.xlu0 %v364, %s1118
        %v1120 = vpop.permute.xlu0 %1119
        %s1122 = sor.u32 256, 2
        %1123 = vbcast.lane.b32.xlu0 %v375, %s1122
        %v1124 = vpop.permute.xlu0 %1123
        %s1126 = sor.u32 256, 10
        %1127 = vbcast.lane.b32.xlu0 %v375, %s1126
        %v1128 = vpop.permute.xlu0 %1127
        %s1130 = sor.u32 256, 2
        %1131 = vbcast.lane.b32.xlu0 %v386, %s1130
        %v1132 = vpop.permute.xlu0 %1131
        %s1134 = sor.u32 256, 10
        %1135 = vbcast.lane.b32.xlu0 %v386, %s1134
        %v1136 = vpop.permute.xlu0 %1135
        %s1138 = sor.u32 256, 2
        %1139 = vbcast.lane.b32.xlu0 %v397, %s1138
        %v1140 = vpop.permute.xlu0 %1139
        %s1142 = sor.u32 256, 10
        %1143 = vbcast.lane.b32.xlu0 %v397, %s1142
        %v1144 = vpop.permute.xlu0 %1143
        %s1146 = sor.u32 256, 2
        %1147 = vbcast.lane.b32.xlu0 %v408, %s1146
        %v1148 = vpop.permute.xlu0 %1147
        %s1150 = sor.u32 256, 10
        %1151 = vbcast.lane.b32.xlu0 %v408, %s1150
        %v1152 = vpop.permute.xlu0 %1151
        %s1154 = sor.u32 256, 2
        %1155 = vbcast.lane.b32.xlu0 %v419, %s1154
        %v1156 = vpop.permute.xlu0 %1155
        %s1158 = sor.u32 256, 10
        %1159 = vbcast.lane.b32.xlu0 %v419, %s1158
        %v1160 = vpop.permute.xlu0 %1159
        %s1162 = sor.u32 256, 2
        %1163 = vbcast.lane.b32.xlu0 %v430, %s1162
        %v1164 = vpop.permute.xlu0 %1163
        %s1166 = sor.u32 256, 10
        %1167 = vbcast.lane.b32.xlu0 %v430, %s1166
        %v1168 = vpop.permute.xlu0 %1167
        %s1170 = sor.u32 256, 2
        %1171 = vbcast.lane.b32.xlu0 %v441, %s1170
        %v1172 = vpop.permute.xlu0 %1171
        %s1174 = sor.u32 256, 10
        %1175 = vbcast.lane.b32.xlu0 %v441, %s1174
        %v1176 = vpop.permute.xlu0 %1175
        %s1178 = sor.u32 256, 2
        %1179 = vbcast.lane.b32.xlu0 %v452, %s1178
        %v1180 = vpop.permute.xlu0 %1179
        %s1182 = sor.u32 256, 10
        %1183 = vbcast.lane.b32.xlu0 %v452, %s1182
        %v1184 = vpop.permute.xlu0 %1183
        %s1186 = sor.u32 256, 2
        %1187 = vbcast.lane.b32.xlu0 %v463, %s1186
        %v1188 = vpop.permute.xlu0 %1187
        %s1190 = sor.u32 256, 10
        %1191 = vbcast.lane.b32.xlu0 %v463, %s1190
        %v1192 = vpop.permute.xlu0 %1191
        %s1194 = sor.u32 256, 2
        %1195 = vbcast.lane.b32.xlu0 %v474, %s1194
        %v1196 = vpop.permute.xlu0 %1195
        %s1198 = sor.u32 256, 10
        %1199 = vbcast.lane.b32.xlu0 %v474, %s1198
        %v1200 = vpop.permute.xlu0 %1199
        %s1201 = scalar_lea.vmem [#allocation7], 2
        %v1202 = vld [vmem:[%s1201] sm:$0x1]
        %v1204 = vlaneseq
        %v1205 = vshrl.u32 %v1204, 7
        %v1206 = vsub.s32 0, %v1205
        %v1207 = vrot.slane %v1202, %v1206
        %v1209 = vmul.f32 %v1060, %v1207
        %v1210 = vmul.f32 %v1064, %v1207
        %v1211 = vmul.f32 %v1068, %v1207
        %v1212 = vmul.f32 %v1072, %v1207
        %v1213 = vmul.f32 %v1076, %v1207
        %v1214 = vmul.f32 %v1080, %v1207
        %v1215 = vmul.f32 %v1084, %v1207
        %v1216 = vmul.f32 %v1088, %v1207
        %v1217 = vmul.f32 %v1092, %v1207
        %v1218 = vmul.f32 %v1096, %v1207
        %v1219 = vmul.f32 %v1100, %v1207
        %v1220 = vmul.f32 %v1104, %v1207
        %v1221 = vmul.f32 %v1108, %v1207
        %v1222 = vmul.f32 %v1112, %v1207
        %v1223 = vmul.f32 %v1116, %v1207
        %v1224 = vmul.f32 %v1120, %v1207
        %v1225 = vmul.f32 %v1124, %v1207
        %v1226 = vmul.f32 %v1128, %v1207
        %v1227 = vmul.f32 %v1132, %v1207
        %v1228 = vmul.f32 %v1136, %v1207
        %v1229 = vmul.f32 %v1140, %v1207
        %v1230 = vmul.f32 %v1144, %v1207
        %v1231 = vmul.f32 %v1148, %v1207
        %v1232 = vmul.f32 %v1152, %v1207
        %v1233 = vmul.f32 %v1156, %v1207
        %v1234 = vmul.f32 %v1160, %v1207
        %v1235 = vmul.f32 %v1164, %v1207
        %v1236 = vmul.f32 %v1168, %v1207
        %v1237 = vmul.f32 %v1172, %v1207
        %v1238 = vmul.f32 %v1176, %v1207
        %v1239 = vmul.f32 %v1180, %v1207
        %v1240 = vmul.f32 %v1184, %v1207
        %v1241 = vadd.f32 %v1025, %v1209
        %v1242 = vadd.f32 %v1026, %v1210
        %v1243 = vadd.f32 %v1027, %v1211
        %v1244 = vadd.f32 %v1028, %v1212
        %v1245 = vadd.f32 %v1029, %v1213
        %v1246 = vadd.f32 %v1030, %v1214
        %v1247 = vadd.f32 %v1031, %v1215
        %v1248 = vadd.f32 %v1032, %v1216
        %v1249 = vadd.f32 %v1033, %v1217
        %v1250 = vadd.f32 %v1034, %v1218
        %v1251 = vadd.f32 %v1035, %v1219
        %v1252 = vadd.f32 %v1036, %v1220
        %v1253 = vadd.f32 %v1037, %v1221
        %v1254 = vadd.f32 %v1038, %v1222
        %v1255 = vadd.f32 %v1039, %v1223
        %v1256 = vadd.f32 %v1040, %v1224
        %v1257 = vadd.f32 %v1041, %v1225
        %v1258 = vadd.f32 %v1042, %v1226
        %v1259 = vadd.f32 %v1043, %v1227
        %v1260 = vadd.f32 %v1044, %v1228
        %v1261 = vadd.f32 %v1045, %v1229
        %v1262 = vadd.f32 %v1046, %v1230
        %v1263 = vadd.f32 %v1047, %v1231
        %v1264 = vadd.f32 %v1048, %v1232
        %v1265 = vadd.f32 %v1049, %v1233
        %v1266 = vadd.f32 %v1050, %v1234
        %v1267 = vadd.f32 %v1051, %v1235
        %v1268 = vadd.f32 %v1052, %v1236
        %v1269 = vadd.f32 %v1053, %v1237
        %v1270 = vadd.f32 %v1054, %v1238
        %v1271 = vadd.f32 %v1055, %v1239
        %v1272 = vadd.f32 %v1056, %v1240
        %s1273 = scalar_lea.vmem [#allocation7], 5
        %v1274 = vld [vmem:[%s1273] sm:$0x1]
        %v1276 = vlaneseq
        %v1277 = vshrl.u32 %v1276, 7
        %v1278 = vsub.s32 0, %v1277
        %v1279 = vrot.slane %v1274, %v1278
        %v1281 = vmul.f32 %v1068, %v1279
        %v1282 = vmul.f32 %v1072, %v1279
        %v1283 = vmul.f32 %v1076, %v1279
        %v1284 = vmul.f32 %v1080, %v1279
        %v1285 = vmul.f32 %v1084, %v1279
        %v1286 = vmul.f32 %v1088, %v1279
        %v1287 = vmul.f32 %v1092, %v1279
        %v1288 = vmul.f32 %v1096, %v1279
        %v1289 = vmul.f32 %v1100, %v1279
        %v1290 = vmul.f32 %v1104, %v1279
        %v1291 = vmul.f32 %v1108, %v1279
        %v1292 = vmul.f32 %v1112, %v1279
        %v1293 = vmul.f32 %v1116, %v1279
        %v1294 = vmul.f32 %v1120, %v1279
        %v1295 = vmul.f32 %v1124, %v1279
        %v1296 = vmul.f32 %v1128, %v1279
        %v1297 = vmul.f32 %v1132, %v1279
        %v1298 = vmul.f32 %v1136, %v1279
        %v1299 = vmul.f32 %v1140, %v1279
        %v1300 = vmul.f32 %v1144, %v1279
        %v1301 = vmul.f32 %v1148, %v1279
        %v1302 = vmul.f32 %v1152, %v1279
        %v1303 = vmul.f32 %v1156, %v1279
        %v1304 = vmul.f32 %v1160, %v1279
        %v1305 = vmul.f32 %v1164, %v1279
        %v1306 = vmul.f32 %v1168, %v1279
        %v1307 = vmul.f32 %v1172, %v1279
        %v1308 = vmul.f32 %v1176, %v1279
        %v1309 = vmul.f32 %v1180, %v1279
        %v1310 = vmul.f32 %v1184, %v1279
        %v1311 = vmul.f32 %v1188, %v1279
        %v1312 = vmul.f32 %v1192, %v1279
        %v1313 = vadd.f32 %v1241, %v1281
        %v1314 = vadd.f32 %v1242, %v1282
        %v1315 = vadd.f32 %v1243, %v1283
        %v1316 = vadd.f32 %v1244, %v1284
        %v1317 = vadd.f32 %v1245, %v1285
        %v1318 = vadd.f32 %v1246, %v1286
        %v1319 = vadd.f32 %v1247, %v1287
        %v1320 = vadd.f32 %v1248, %v1288
        %v1321 = vadd.f32 %v1249, %v1289
        %v1322 = vadd.f32 %v1250, %v1290
        %v1323 = vadd.f32 %v1251, %v1291
        %v1324 = vadd.f32 %v1252, %v1292
        %v1325 = vadd.f32 %v1253, %v1293
        %v1326 = vadd.f32 %v1254, %v1294
        %v1327 = vadd.f32 %v1255, %v1295
        %v1328 = vadd.f32 %v1256, %v1296
        %v1329 = vadd.f32 %v1257, %v1297
        %v1330 = vadd.f32 %v1258, %v1298
        %v1331 = vadd.f32 %v1259, %v1299
        %v1332 = vadd.f32 %v1260, %v1300
        %v1333 = vadd.f32 %v1261, %v1301
        %v1334 = vadd.f32 %v1262, %v1302
        %v1335 = vadd.f32 %v1263, %v1303
        %v1336 = vadd.f32 %v1264, %v1304
        %v1337 = vadd.f32 %v1265, %v1305
        %v1338 = vadd.f32 %v1266, %v1306
        %v1339 = vadd.f32 %v1267, %v1307
        %v1340 = vadd.f32 %v1268, %v1308
        %v1341 = vadd.f32 %v1269, %v1309
        %v1342 = vadd.f32 %v1270, %v1310
        %v1343 = vadd.f32 %v1271, %v1311
        %v1344 = vadd.f32 %v1272, %v1312
        %s1345 = scalar_lea.vmem [#allocation7], 8
        %v1346 = vld [vmem:[%s1345] sm:$0x1]
        %v1348 = vlaneseq
        %v1349 = vshrl.u32 %v1348, 7
        %v1350 = vsub.s32 0, %v1349
        %v1351 = vrot.slane %v1346, %v1350
        %v1353 = vmul.f32 %v1076, %v1351
        %v1354 = vmul.f32 %v1080, %v1351
        %v1355 = vmul.f32 %v1084, %v1351
        %v1356 = vmul.f32 %v1088, %v1351
        %v1357 = vmul.f32 %v1092, %v1351
        %v1358 = vmul.f32 %v1096, %v1351
        %v1359 = vmul.f32 %v1100, %v1351
        %v1360 = vmul.f32 %v1104, %v1351
        %v1361 = vmul.f32 %v1108, %v1351
        %v1362 = vmul.f32 %v1112, %v1351
        %v1363 = vmul.f32 %v1116, %v1351
        %v1364 = vmul.f32 %v1120, %v1351
        %v1365 = vmul.f32 %v1124, %v1351
        %v1366 = vmul.f32 %v1128, %v1351
        %v1367 = vmul.f32 %v1132, %v1351
        %v1368 = vmul.f32 %v1136, %v1351
        %v1369 = vmul.f32 %v1140, %v1351
        %v1370 = vmul.f32 %v1144, %v1351
        %v1371 = vmul.f32 %v1148, %v1351
        %v1372 = vmul.f32 %v1152, %v1351
        %v1373 = vmul.f32 %v1156, %v1351
        %v1374 = vmul.f32 %v1160, %v1351
        %v1375 = vmul.f32 %v1164, %v1351
        %v1376 = vmul.f32 %v1168, %v1351
        %v1377 = vmul.f32 %v1172, %v1351
        %v1378 = vmul.f32 %v1176, %v1351
        %v1379 = vmul.f32 %v1180, %v1351
        %v1380 = vmul.f32 %v1184, %v1351
        %v1381 = vmul.f32 %v1188, %v1351
        %v1382 = vmul.f32 %v1192, %v1351
        %v1383 = vmul.f32 %v1196, %v1351
        %v1384 = vmul.f32 %v1200, %v1351
        %v1385 = vadd.f32 %v1313, %v1353
        %v1386 = vadd.f32 %v1314, %v1354
        %v1387 = vadd.f32 %v1315, %v1355
        %v1388 = vadd.f32 %v1316, %v1356
        %v1389 = vadd.f32 %v1317, %v1357
        %v1390 = vadd.f32 %v1318, %v1358
        %v1391 = vadd.f32 %v1319, %v1359
        %v1392 = vadd.f32 %v1320, %v1360
        %v1393 = vadd.f32 %v1321, %v1361
        %v1394 = vadd.f32 %v1322, %v1362
        %v1395 = vadd.f32 %v1323, %v1363
        %v1396 = vadd.f32 %v1324, %v1364
        %v1397 = vadd.f32 %v1325, %v1365
        %v1398 = vadd.f32 %v1326, %v1366
        %v1399 = vadd.f32 %v1327, %v1367
        %v1400 = vadd.f32 %v1328, %v1368
        %v1401 = vadd.f32 %v1329, %v1369
        %v1402 = vadd.f32 %v1330, %v1370
        %v1403 = vadd.f32 %v1331, %v1371
        %v1404 = vadd.f32 %v1332, %v1372
        %v1405 = vadd.f32 %v1333, %v1373
        %v1406 = vadd.f32 %v1334, %v1374
        %v1407 = vadd.f32 %v1335, %v1375
        %v1408 = vadd.f32 %v1336, %v1376
        %v1409 = vadd.f32 %v1337, %v1377
        %v1410 = vadd.f32 %v1338, %v1378
        %v1411 = vadd.f32 %v1339, %v1379
        %v1412 = vadd.f32 %v1340, %v1380
        %v1413 = vadd.f32 %v1341, %v1381
        %v1414 = vadd.f32 %v1342, %v1382
        %v1415 = vadd.f32 %v1343, %v1383
        %v1416 = vadd.f32 %v1344, %v1384
        %v1417 = vld [vmem:[%s2] sm:$0x1]
        %v1419 = vlaneseq
        %v1420 = vshrl.u32 %v1419, 7
        %v1421 = vsub.s32 0, %v1420
        %v1422 = vrot.slane %v1417, %v1421
        %v1424 = vmul.f32 %v1385, %v1422
        %v1425 = vmul.f32 %v1386, %v1422
        %v1426 = vmul.f32 %v1387, %v1422
        %v1427 = vmul.f32 %v1388, %v1422
        %v1428 = vmul.f32 %v1389, %v1422
        %v1429 = vmul.f32 %v1390, %v1422
        %v1430 = vmul.f32 %v1391, %v1422
        %v1431 = vmul.f32 %v1392, %v1422
        %v1432 = vmul.f32 %v1393, %v1422
        %v1433 = vmul.f32 %v1394, %v1422
        %v1434 = vmul.f32 %v1395, %v1422
        %v1435 = vmul.f32 %v1396, %v1422
        %v1436 = vmul.f32 %v1397, %v1422
        %v1437 = vmul.f32 %v1398, %v1422
        %v1438 = vmul.f32 %v1399, %v1422
        %v1439 = vmul.f32 %v1400, %v1422
        %v1440 = vmul.f32 %v1401, %v1422
        %v1441 = vmul.f32 %v1402, %v1422
        %v1442 = vmul.f32 %v1403, %v1422
        %v1443 = vmul.f32 %v1404, %v1422
        %v1444 = vmul.f32 %v1405, %v1422
        %v1445 = vmul.f32 %v1406, %v1422
        %v1446 = vmul.f32 %v1407, %v1422
        %v1447 = vmul.f32 %v1408, %v1422
        %v1448 = vmul.f32 %v1409, %v1422
        %v1449 = vmul.f32 %v1410, %v1422
        %v1450 = vmul.f32 %v1411, %v1422
        %v1451 = vmul.f32 %v1412, %v1422
        %v1452 = vmul.f32 %v1413, %v1422
        %v1453 = vmul.f32 %v1414, %v1422
        %v1454 = vmul.f32 %v1415, %v1422
        %v1455 = vmul.f32 %v1416, %v1422
        %v1456 = vld [vmem:[%s3] sm:$0x1]
        %v1458 = vlaneseq
        %v1459 = vshrl.u32 %v1458, 7
        %v1460 = vsub.s32 0, %v1459
        %v1461 = vrot.slane %v1456, %v1460
        %v1463 = vadd.f32 %v1424, %v1461
        %v1464 = vadd.f32 %v1425, %v1461
        %v1465 = vadd.f32 %v1426, %v1461
        %v1466 = vadd.f32 %v1427, %v1461
        %v1467 = vadd.f32 %v1428, %v1461
        %v1468 = vadd.f32 %v1429, %v1461
        %v1469 = vadd.f32 %v1430, %v1461
        %v1470 = vadd.f32 %v1431, %v1461
        %v1471 = vadd.f32 %v1432, %v1461
        %v1472 = vadd.f32 %v1433, %v1461
        %v1473 = vadd.f32 %v1434, %v1461
        %v1474 = vadd.f32 %v1435, %v1461
        %v1475 = vadd.f32 %v1436, %v1461
        %v1476 = vadd.f32 %v1437, %v1461
        %v1477 = vadd.f32 %v1438, %v1461
        %v1478 = vadd.f32 %v1439, %v1461
        %v1479 = vadd.f32 %v1440, %v1461
        %v1480 = vadd.f32 %v1441, %v1461
        %v1481 = vadd.f32 %v1442, %v1461
        %v1482 = vadd.f32 %v1443, %v1461
        %v1483 = vadd.f32 %v1444, %v1461
        %v1484 = vadd.f32 %v1445, %v1461
        %v1485 = vadd.f32 %v1446, %v1461
        %v1486 = vadd.f32 %v1447, %v1461
        %v1487 = vadd.f32 %v1448, %v1461
        %v1488 = vadd.f32 %v1449, %v1461
        %v1489 = vadd.f32 %v1450, %v1461
        %v1490 = vadd.f32 %v1451, %v1461
        %v1491 = vadd.f32 %v1452, %v1461
        %v1492 = vadd.f32 %v1453, %v1461
        %v1493 = vadd.f32 %v1454, %v1461
        %v1494 = vadd.f32 %v1455, %v1461
        %v1495 = vmax.f32 %v1463, 0.0
        %v1496 = vmax.f32 %v1464, 0.0
        %v1497 = vmax.f32 %v1465, 0.0
        %v1498 = vmax.f32 %v1466, 0.0
        %v1499 = vmax.f32 %v1467, 0.0
        %v1500 = vmax.f32 %v1468, 0.0
        %v1501 = vmax.f32 %v1469, 0.0
        %v1502 = vmax.f32 %v1470, 0.0
        %v1503 = vmax.f32 %v1471, 0.0
        %v1504 = vmax.f32 %v1472, 0.0
        %v1505 = vmax.f32 %v1473, 0.0
        %v1506 = vmax.f32 %v1474, 0.0
        %v1507 = vmax.f32 %v1475, 0.0
        %v1508 = vmax.f32 %v1476, 0.0
        %v1509 = vmax.f32 %v1477, 0.0
        %v1510 = vmax.f32 %v1478, 0.0
        %v1511 = vmax.f32 %v1479, 0.0
        %v1512 = vmax.f32 %v1480, 0.0
        %v1513 = vmax.f32 %v1481, 0.0
        %v1514 = vmax.f32 %v1482, 0.0
        %v1515 = vmax.f32 %v1483, 0.0
        %v1516 = vmax.f32 %v1484, 0.0
        %v1517 = vmax.f32 %v1485, 0.0
        %v1518 = vmax.f32 %v1486, 0.0
        %v1519 = vmax.f32 %v1487, 0.0
        %v1520 = vmax.f32 %v1488, 0.0
        %v1521 = vmax.f32 %v1489, 0.0
        %v1522 = vmax.f32 %v1490, 0.0
        %v1523 = vmax.f32 %v1491, 0.0
        %v1524 = vmax.f32 %v1492, 0.0
        %v1525 = vmax.f32 %v1493, 0.0
        %v1526 = vmax.f32 %v1494, 0.0
        %v1527 = vadd.f32 %v1495, %v708
        %v1528 = vadd.f32 %v1496, %v712
        %v1529 = vadd.f32 %v1497, %v716
        %v1530 = vadd.f32 %v1498, %v720
        %v1531 = vadd.f32 %v1499, %v724
        %v1532 = vadd.f32 %v1500, %v728
        %v1533 = vadd.f32 %v1501, %v732
        %v1534 = vadd.f32 %v1502, %v736
        %v1535 = vadd.f32 %v1503, %v740
        %v1536 = vadd.f32 %v1504, %v744
        %v1537 = vadd.f32 %v1505, %v748
        %v1538 = vadd.f32 %v1506, %v752
        %v1539 = vadd.f32 %v1507, %v756
        %v1540 = vadd.f32 %v1508, %v760
        %v1541 = vadd.f32 %v1509, %v764
        %v1542 = vadd.f32 %v1510, %v768
        %v1543 = vadd.f32 %v1511, %v772
        %v1544 = vadd.f32 %v1512, %v776
        %v1545 = vadd.f32 %v1513, %v780
        %v1546 = vadd.f32 %v1514, %v784
        %v1547 = vadd.f32 %v1515, %v788
        %v1548 = vadd.f32 %v1516, %v792
        %v1549 = vadd.f32 %v1517, %v796
        %v1550 = vadd.f32 %v1518, %v800
        %v1551 = vadd.f32 %v1519, %v804
        %v1552 = vadd.f32 %v1520, %v808
        %v1553 = vadd.f32 %v1521, %v812
        %v1554 = vadd.f32 %v1522, %v816
        %v1555 = vadd.f32 %v1523, %v820
        %v1556 = vadd.f32 %v1524, %v824
        %v1557 = vadd.f32 %v1525, %v828
        %v1558 = vadd.f32 %v1526, %v832
        %v1559 = vmax.f32 %v1527, 1e-06
        %v1560 = vmax.f32 %v1528, 1e-06
        %v1561 = vmax.f32 %v1529, 1e-06
        %v1562 = vmax.f32 %v1530, 1e-06
        %v1563 = vmax.f32 %v1531, 1e-06
        %v1564 = vmax.f32 %v1532, 1e-06
        %v1565 = vmax.f32 %v1533, 1e-06
        %v1566 = vmax.f32 %v1534, 1e-06
        %v1567 = vmax.f32 %v1535, 1e-06
        %v1568 = vmax.f32 %v1536, 1e-06
        %v1569 = vmax.f32 %v1537, 1e-06
        %v1570 = vmax.f32 %v1538, 1e-06
        %v1571 = vmax.f32 %v1539, 1e-06
        %v1572 = vmax.f32 %v1540, 1e-06
        %v1573 = vmax.f32 %v1541, 1e-06
        %v1574 = vmax.f32 %v1542, 1e-06
        %v1575 = vmax.f32 %v1543, 1e-06
        %v1576 = vmax.f32 %v1544, 1e-06
        %v1577 = vmax.f32 %v1545, 1e-06
        %v1578 = vmax.f32 %v1546, 1e-06
        %v1579 = vmax.f32 %v1547, 1e-06
        %v1580 = vmax.f32 %v1548, 1e-06
        %v1581 = vmax.f32 %v1549, 1e-06
        %v1582 = vmax.f32 %v1550, 1e-06
        %v1583 = vmax.f32 %v1551, 1e-06
        %v1584 = vmax.f32 %v1552, 1e-06
        %v1585 = vmax.f32 %v1553, 1e-06
        %v1586 = vmax.f32 %v1554, 1e-06
        %v1587 = vmax.f32 %v1555, 1e-06
        %v1588 = vmax.f32 %v1556, 1e-06
        %v1589 = vmax.f32 %v1557, 1e-06
        %v1590 = vmax.f32 %v1558, 1e-06
        %v1591 = vlog2.pop %v1559
        %v1592 = vmul.f32 %v1591, 0.6931472
        %v1593 = vlog2.pop %v1560
        %v1594 = vmul.f32 %v1593, 0.6931472
        %v1595 = vlog2.pop %v1561
        %v1596 = vmul.f32 %v1595, 0.6931472
        %v1597 = vlog2.pop %v1562
        %v1598 = vmul.f32 %v1597, 0.6931472
        %v1599 = vlog2.pop %v1563
        %v1600 = vmul.f32 %v1599, 0.6931472
        %v1601 = vlog2.pop %v1564
        %v1602 = vmul.f32 %v1601, 0.6931472
        %v1603 = vlog2.pop %v1565
        %v1604 = vmul.f32 %v1603, 0.6931472
        %v1605 = vlog2.pop %v1566
        %v1606 = vmul.f32 %v1605, 0.6931472
        %v1607 = vlog2.pop %v1567
        %v1608 = vmul.f32 %v1607, 0.6931472
        %v1609 = vlog2.pop %v1568
        %v1610 = vmul.f32 %v1609, 0.6931472
        %v1611 = vlog2.pop %v1569
        %v1612 = vmul.f32 %v1611, 0.6931472
        %v1613 = vlog2.pop %v1570
        %v1614 = vmul.f32 %v1613, 0.6931472
        %v1615 = vlog2.pop %v1571
        %v1616 = vmul.f32 %v1615, 0.6931472
        %v1617 = vlog2.pop %v1572
        %v1618 = vmul.f32 %v1617, 0.6931472
        %v1619 = vlog2.pop %v1573
        %v1620 = vmul.f32 %v1619, 0.6931472
        %v1621 = vlog2.pop %v1574
        %v1622 = vmul.f32 %v1621, 0.6931472
        %v1623 = vlog2.pop %v1575
        %v1624 = vmul.f32 %v1623, 0.6931472
        %v1625 = vlog2.pop %v1576
        %v1626 = vmul.f32 %v1625, 0.6931472
        %v1627 = vlog2.pop %v1577
        %v1628 = vmul.f32 %v1627, 0.6931472
        %v1629 = vlog2.pop %v1578
        %v1630 = vmul.f32 %v1629, 0.6931472
        %v1631 = vlog2.pop %v1579
        %v1632 = vmul.f32 %v1631, 0.6931472
        %v1633 = vlog2.pop %v1580
        %v1634 = vmul.f32 %v1633, 0.6931472
        %v1635 = vlog2.pop %v1581
        %v1636 = vmul.f32 %v1635, 0.6931472
        %v1637 = vlog2.pop %v1582
        %v1638 = vmul.f32 %v1637, 0.6931472
        %v1639 = vlog2.pop %v1583
        %v1640 = vmul.f32 %v1639, 0.6931472
        %v1641 = vlog2.pop %v1584
        %v1642 = vmul.f32 %v1641, 0.6931472
        %v1643 = vlog2.pop %v1585
        %v1644 = vmul.f32 %v1643, 0.6931472
        %v1645 = vlog2.pop %v1586
        %v1646 = vmul.f32 %v1645, 0.6931472
        %v1647 = vlog2.pop %v1587
        %v1648 = vmul.f32 %v1647, 0.6931472
        %v1649 = vlog2.pop %v1588
        %v1650 = vmul.f32 %v1649, 0.6931472
        %v1651 = vlog2.pop %v1589
        %v1652 = vmul.f32 %v1651, 0.6931472
        %v1653 = vlog2.pop %v1590
        %v1654 = vmul.f32 %v1653, 0.6931472
        %v1655 = vstv %s259
        %v1656 = vmul.f32 %v1655, %v1592
        %v1657 = vmul.f32 %v1655, %v1594
        %v1658 = vmul.f32 %v1655, %v1596
        %v1659 = vmul.f32 %v1655, %v1598
        %v1660 = vmul.f32 %v1655, %v1600
        %v1661 = vmul.f32 %v1655, %v1602
        %v1662 = vmul.f32 %v1655, %v1604
        %v1663 = vmul.f32 %v1655, %v1606
        %v1664 = vmul.f32 %v1655, %v1608
        %v1665 = vmul.f32 %v1655, %v1610
        %v1666 = vmul.f32 %v1655, %v1612
        %v1667 = vmul.f32 %v1655, %v1614
        %v1668 = vmul.f32 %v1655, %v1616
        %v1669 = vmul.f32 %v1655, %v1618
        %v1670 = vmul.f32 %v1655, %v1620
        %v1671 = vmul.f32 %v1655, %v1622
        %v1672 = vmul.f32 %v1655, %v1624
        %v1673 = vmul.f32 %v1655, %v1626
        %v1674 = vmul.f32 %v1655, %v1628
        %v1675 = vmul.f32 %v1655, %v1630
        %v1676 = vmul.f32 %v1655, %v1632
        %v1677 = vmul.f32 %v1655, %v1634
        %v1678 = vmul.f32 %v1655, %v1636
        %v1679 = vmul.f32 %v1655, %v1638
        %v1680 = vmul.f32 %v1655, %v1640
        %v1681 = vmul.f32 %v1655, %v1642
        %v1682 = vmul.f32 %v1655, %v1644
        %v1683 = vmul.f32 %v1655, %v1646
        %v1684 = vmul.f32 %v1655, %v1648
        %v1685 = vmul.f32 %v1655, %v1650
        %v1686 = vmul.f32 %v1655, %v1652
        %v1687 = vmul.f32 %v1655, %v1654
        %v1688 = vmul.f32 %v1656, 1.442695
        %v1689 = vpow.pop %v1688
        %v1690 = vmul.f32 %v1657, 1.442695
        %v1691 = vpow.pop %v1690
        %v1692 = vmul.f32 %v1658, 1.442695
        %v1693 = vpow.pop %v1692
        %v1694 = vmul.f32 %v1659, 1.442695
        %v1695 = vpow.pop %v1694
        %v1696 = vmul.f32 %v1660, 1.442695
        %v1697 = vpow.pop %v1696
        %v1698 = vmul.f32 %v1661, 1.442695
        %v1699 = vpow.pop %v1698
        %v1700 = vmul.f32 %v1662, 1.442695
        %v1701 = vpow.pop %v1700
        %v1702 = vmul.f32 %v1663, 1.442695
        %v1703 = vpow.pop %v1702
        %v1704 = vmul.f32 %v1664, 1.442695
        %v1705 = vpow.pop %v1704
        %v1706 = vmul.f32 %v1665, 1.442695
        %v1707 = vpow.pop %v1706
        %v1708 = vmul.f32 %v1666, 1.442695
        %v1709 = vpow.pop %v1708
        %v1710 = vmul.f32 %v1667, 1.442695
        %v1711 = vpow.pop %v1710
        %v1712 = vmul.f32 %v1668, 1.442695
        %v1713 = vpow.pop %v1712
        %v1714 = vmul.f32 %v1669, 1.442695
        %v1715 = vpow.pop %v1714
        %v1716 = vmul.f32 %v1670, 1.442695
        %v1717 = vpow.pop %v1716
        %v1718 = vmul.f32 %v1671, 1.442695
        %v1719 = vpow.pop %v1718
        %v1720 = vmul.f32 %v1672, 1.442695
        %v1721 = vpow.pop %v1720
        %v1722 = vmul.f32 %v1673, 1.442695
        %v1723 = vpow.pop %v1722
        %v1724 = vmul.f32 %v1674, 1.442695
        %v1725 = vpow.pop %v1724
        %v1726 = vmul.f32 %v1675, 1.442695
        %v1727 = vpow.pop %v1726
        %v1728 = vmul.f32 %v1676, 1.442695
        %v1729 = vpow.pop %v1728
        %v1730 = vmul.f32 %v1677, 1.442695
        %v1731 = vpow.pop %v1730
        %v1732 = vmul.f32 %v1678, 1.442695
        %v1733 = vpow.pop %v1732
        %v1734 = vmul.f32 %v1679, 1.442695
        %v1735 = vpow.pop %v1734
        %v1736 = vmul.f32 %v1680, 1.442695
        %v1737 = vpow.pop %v1736
        %v1738 = vmul.f32 %v1681, 1.442695
        %v1739 = vpow.pop %v1738
        %v1740 = vmul.f32 %v1682, 1.442695
        %v1741 = vpow.pop %v1740
        %v1742 = vmul.f32 %v1683, 1.442695
        %v1743 = vpow.pop %v1742
        %v1744 = vmul.f32 %v1684, 1.442695
        %v1745 = vpow.pop %v1744
        %v1746 = vmul.f32 %v1685, 1.442695
        %v1747 = vpow.pop %v1746
        %v1748 = vmul.f32 %v1686, 1.442695
        %v1749 = vpow.pop %v1748
        %v1750 = vmul.f32 %v1687, 1.442695
        %v1751 = vpow.pop %v1750
        %v1752 = vadd.f32 %v1689, %v1693
        %v1753 = vadd.f32 %v1691, %v1695
        %v1754 = vadd.f32 %v1697, %v1701
        %v1755 = vadd.f32 %v1699, %v1703
        %v1756 = vadd.f32 %v1705, %v1709
        %v1757 = vadd.f32 %v1707, %v1711
        %v1758 = vadd.f32 %v1713, %v1717
        %v1759 = vadd.f32 %v1715, %v1719
        %v1760 = vadd.f32 %v1721, %v1725
        %v1761 = vadd.f32 %v1723, %v1727
        %v1762 = vadd.f32 %v1729, %v1733
        %v1763 = vadd.f32 %v1731, %v1735
        %v1764 = vadd.f32 %v1737, %v1741
        %v1765 = vadd.f32 %v1739, %v1743
        %v1766 = vadd.f32 %v1745, %v1749
        %v1767 = vadd.f32 %v1747, %v1751
        %v1784 = vcombine.high %v1752, %v1752
        %v1786 = vunpack.c.l.s4 1983009808
        %v1787 = vunpack.c.0.s8 %v1786
        %v1788 = vlaneseq
        %v1789 = vshrl.u32 %v1788, 7
        %v1790 = vsub.s32 %v1787, %v1789
        %v1791 = vrot.slane %v1752, %v1790
        %v1793 = vunpack.c.l.s4 1983009808
        %v1794 = vunpack.c.0.s8 %v1793
        %v1795 = vlaneseq
        %v1796 = vshrl.u32 %v1795, 7
        %v1797 = vsub.s32 %v1794, %v1796
        %v1798 = vrot.slane %v1784, %v1797
        %v1799 = vcombine.high %v1791, %v1791
        %v1800 = vcombine.high %v1798, %v1798
        %v1801 = vcombine.high %v1753, %v1753
        %v1803 = vunpack.c.l.s4 1983009808
        %v1804 = vunpack.c.0.s8 %v1803
        %v1805 = vlaneseq
        %v1806 = vshrl.u32 %v1805, 7
        %v1807 = vsub.s32 %v1804, %v1806
        %v1808 = vrot.slane %v1753, %v1807
        %v1810 = vunpack.c.l.s4 1983009808
        %v1811 = vunpack.c.0.s8 %v1810
        %v1812 = vlaneseq
        %v1813 = vshrl.u32 %v1812, 7
        %v1814 = vsub.s32 %v1811, %v1813
        %v1815 = vrot.slane %v1801, %v1814
        %v1816 = vcombine.high %v1808, %v1808
        %v1817 = vcombine.high %v1815, %v1815
        %v1818 = vcombine.high %v1754, %v1754
        %v1820 = vunpack.c.l.s4 1983009808
        %v1821 = vunpack.c.0.s8 %v1820
        %v1822 = vlaneseq
        %v1823 = vshrl.u32 %v1822, 7
        %v1824 = vsub.s32 %v1821, %v1823
        %v1825 = vrot.slane %v1754, %v1824
        %v1827 = vunpack.c.l.s4 1983009808
        %v1828 = vunpack.c.0.s8 %v1827
        %v1829 = vlaneseq
        %v1830 = vshrl.u32 %v1829, 7
        %v1831 = vsub.s32 %v1828, %v1830
        %v1832 = vrot.slane %v1818, %v1831
        %v1833 = vcombine.high %v1825, %v1825
        %v1834 = vcombine.high %v1832, %v1832
        %v1835 = vcombine.high %v1755, %v1755
        %v1837 = vunpack.c.l.s4 1983009808
        %v1838 = vunpack.c.0.s8 %v1837
        %v1839 = vlaneseq
        %v1840 = vshrl.u32 %v1839, 7
        %v1841 = vsub.s32 %v1838, %v1840
        %v1842 = vrot.slane %v1755, %v1841
        %v1844 = vunpack.c.l.s4 1983009808
        %v1845 = vunpack.c.0.s8 %v1844
        %v1846 = vlaneseq
        %v1847 = vshrl.u32 %v1846, 7
        %v1848 = vsub.s32 %v1845, %v1847
        %v1849 = vrot.slane %v1835, %v1848
        %v1850 = vcombine.high %v1842, %v1842
        %v1851 = vcombine.high %v1849, %v1849
        %v1852 = vcombine.high %v1756, %v1756
        %v1854 = vunpack.c.l.s4 1983009808
        %v1855 = vunpack.c.0.s8 %v1854
        %v1856 = vlaneseq
        %v1857 = vshrl.u32 %v1856, 7
        %v1858 = vsub.s32 %v1855, %v1857
        %v1859 = vrot.slane %v1756, %v1858
        %v1861 = vunpack.c.l.s4 1983009808
        %v1862 = vunpack.c.0.s8 %v1861
        %v1863 = vlaneseq
        %v1864 = vshrl.u32 %v1863, 7
        %v1865 = vsub.s32 %v1862, %v1864
        %v1866 = vrot.slane %v1852, %v1865
        %v1867 = vcombine.high %v1859, %v1859
        %v1868 = vcombine.high %v1866, %v1866
        %v1869 = vcombine.high %v1757, %v1757
        %v1871 = vunpack.c.l.s4 1983009808
        %v1872 = vunpack.c.0.s8 %v1871
        %v1873 = vlaneseq
        %v1874 = vshrl.u32 %v1873, 7
        %v1875 = vsub.s32 %v1872, %v1874
        %v1876 = vrot.slane %v1757, %v1875
        %v1878 = vunpack.c.l.s4 1983009808
        %v1879 = vunpack.c.0.s8 %v1878
        %v1880 = vlaneseq
        %v1881 = vshrl.u32 %v1880, 7
        %v1882 = vsub.s32 %v1879, %v1881
        %v1883 = vrot.slane %v1869, %v1882
        %v1884 = vcombine.high %v1876, %v1876
        %v1885 = vcombine.high %v1883, %v1883
        %v1886 = vcombine.high %v1758, %v1758
        %v1888 = vunpack.c.l.s4 1983009808
        %v1889 = vunpack.c.0.s8 %v1888
        %v1890 = vlaneseq
        %v1891 = vshrl.u32 %v1890, 7
        %v1892 = vsub.s32 %v1889, %v1891
        %v1893 = vrot.slane %v1758, %v1892
        %v1895 = vunpack.c.l.s4 1983009808
        %v1896 = vunpack.c.0.s8 %v1895
        %v1897 = vlaneseq
        %v1898 = vshrl.u32 %v1897, 7
        %v1899 = vsub.s32 %v1896, %v1898
        %v1900 = vrot.slane %v1886, %v1899
        %v1901 = vcombine.high %v1893, %v1893
        %v1902 = vcombine.high %v1900, %v1900
        %v1903 = vcombine.high %v1759, %v1759
        %v1905 = vunpack.c.l.s4 1983009808
        %v1906 = vunpack.c.0.s8 %v1905
        %v1907 = vlaneseq
        %v1908 = vshrl.u32 %v1907, 7
        %v1909 = vsub.s32 %v1906, %v1908
        %v1910 = vrot.slane %v1759, %v1909
        %v1912 = vunpack.c.l.s4 1983009808
        %v1913 = vunpack.c.0.s8 %v1912
        %v1914 = vlaneseq
        %v1915 = vshrl.u32 %v1914, 7
        %v1916 = vsub.s32 %v1913, %v1915
        %v1917 = vrot.slane %v1903, %v1916
        %v1918 = vcombine.high %v1910, %v1910
        %v1919 = vcombine.high %v1917, %v1917
        %v1920 = vcombine.high %v1760, %v1760
        %v1922 = vunpack.c.l.s4 1983009808
        %v1923 = vunpack.c.0.s8 %v1922
        %v1924 = vlaneseq
        %v1925 = vshrl.u32 %v1924, 7
        %v1926 = vsub.s32 %v1923, %v1925
        %v1927 = vrot.slane %v1760, %v1926
        %v1929 = vunpack.c.l.s4 1983009808
        %v1930 = vunpack.c.0.s8 %v1929
        %v1931 = vlaneseq
        %v1932 = vshrl.u32 %v1931, 7
        %v1933 = vsub.s32 %v1930, %v1932
        %v1934 = vrot.slane %v1920, %v1933
        %v1935 = vcombine.high %v1927, %v1927
        %v1936 = vcombine.high %v1934, %v1934
        %v1937 = vcombine.high %v1761, %v1761
        %v1939 = vunpack.c.l.s4 1983009808
        %v1940 = vunpack.c.0.s8 %v1939
        %v1941 = vlaneseq
        %v1942 = vshrl.u32 %v1941, 7
        %v1943 = vsub.s32 %v1940, %v1942
        %v1944 = vrot.slane %v1761, %v1943
        %v1946 = vunpack.c.l.s4 1983009808
        %v1947 = vunpack.c.0.s8 %v1946
        %v1948 = vlaneseq
        %v1949 = vshrl.u32 %v1948, 7
        %v1950 = vsub.s32 %v1947, %v1949
        %v1951 = vrot.slane %v1937, %v1950
        %v1952 = vcombine.high %v1944, %v1944
        %v1953 = vcombine.high %v1951, %v1951
        %v1954 = vcombine.high %v1762, %v1762
        %v1956 = vunpack.c.l.s4 1983009808
        %v1957 = vunpack.c.0.s8 %v1956
        %v1958 = vlaneseq
        %v1959 = vshrl.u32 %v1958, 7
        %v1960 = vsub.s32 %v1957, %v1959
        %v1961 = vrot.slane %v1762, %v1960
        %v1963 = vunpack.c.l.s4 1983009808
        %v1964 = vunpack.c.0.s8 %v1963
        %v1965 = vlaneseq
        %v1966 = vshrl.u32 %v1965, 7
        %v1967 = vsub.s32 %v1964, %v1966
        %v1968 = vrot.slane %v1954, %v1967
        %v1969 = vcombine.high %v1961, %v1961
        %v1970 = vcombine.high %v1968, %v1968
        %v1971 = vcombine.high %v1763, %v1763
        %v1973 = vunpack.c.l.s4 1983009808
        %v1974 = vunpack.c.0.s8 %v1973
        %v1975 = vlaneseq
        %v1976 = vshrl.u32 %v1975, 7
        %v1977 = vsub.s32 %v1974, %v1976
        %v1978 = vrot.slane %v1763, %v1977
        %v1980 = vunpack.c.l.s4 1983009808
        %v1981 = vunpack.c.0.s8 %v1980
        %v1982 = vlaneseq
        %v1983 = vshrl.u32 %v1982, 7
        %v1984 = vsub.s32 %v1981, %v1983
        %v1985 = vrot.slane %v1971, %v1984
        %v1986 = vcombine.high %v1978, %v1978
        %v1987 = vcombine.high %v1985, %v1985
        %v1988 = vcombine.high %v1764, %v1764
        %v1990 = vunpack.c.l.s4 1983009808
        %v1991 = vunpack.c.0.s8 %v1990
        %v1992 = vlaneseq
        %v1993 = vshrl.u32 %v1992, 7
        %v1994 = vsub.s32 %v1991, %v1993
        %v1995 = vrot.slane %v1764, %v1994
        %v1997 = vunpack.c.l.s4 1983009808
        %v1998 = vunpack.c.0.s8 %v1997
        %v1999 = vlaneseq
        %v2000 = vshrl.u32 %v1999, 7
        %v2001 = vsub.s32 %v1998, %v2000
        %v2002 = vrot.slane %v1988, %v2001
        %v2003 = vcombine.high %v1995, %v1995
        %v2004 = vcombine.high %v2002, %v2002
        %v2005 = vcombine.high %v1765, %v1765
        %v2007 = vunpack.c.l.s4 1983009808
        %v2008 = vunpack.c.0.s8 %v2007
        %v2009 = vlaneseq
        %v2010 = vshrl.u32 %v2009, 7
        %v2011 = vsub.s32 %v2008, %v2010
        %v2012 = vrot.slane %v1765, %v2011
        %v2014 = vunpack.c.l.s4 1983009808
        %v2015 = vunpack.c.0.s8 %v2014
        %v2016 = vlaneseq
        %v2017 = vshrl.u32 %v2016, 7
        %v2018 = vsub.s32 %v2015, %v2017
        %v2019 = vrot.slane %v2005, %v2018
        %v2020 = vcombine.high %v2012, %v2012
        %v2021 = vcombine.high %v2019, %v2019
        %v2022 = vcombine.high %v1766, %v1766
        %v2024 = vunpack.c.l.s4 1983009808
        %v2025 = vunpack.c.0.s8 %v2024
        %v2026 = vlaneseq
        %v2027 = vshrl.u32 %v2026, 7
        %v2028 = vsub.s32 %v2025, %v2027
        %v2029 = vrot.slane %v1766, %v2028
        %v2031 = vunpack.c.l.s4 1983009808
        %v2032 = vunpack.c.0.s8 %v2031
        %v2033 = vlaneseq
        %v2034 = vshrl.u32 %v2033, 7
        %v2035 = vsub.s32 %v2032, %v2034
        %v2036 = vrot.slane %v2022, %v2035
        %v2037 = vcombine.high %v2029, %v2029
        %v2038 = vcombine.high %v2036, %v2036
        %v2039 = vcombine.high %v1767, %v1767
        %v2041 = vunpack.c.l.s4 1983009808
        %v2042 = vunpack.c.0.s8 %v2041
        %v2043 = vlaneseq
        %v2044 = vshrl.u32 %v2043, 7
        %v2045 = vsub.s32 %v2042, %v2044
        %v2046 = vrot.slane %v1767, %v2045
        %v2048 = vunpack.c.l.s4 1983009808
        %v2049 = vunpack.c.0.s8 %v2048
        %v2050 = vlaneseq
        %v2051 = vshrl.u32 %v2050, 7
        %v2052 = vsub.s32 %v2049, %v2051
        %v2053 = vrot.slane %v2039, %v2052
        %v2054 = vcombine.high %v2046, %v2046
        %v2055 = vcombine.high %v2053, %v2053
        %v2120 = vrot.slane %v1791, 7
        %v2121 = vrot.slane %v2120, 2
        %v2122 = vrot.slane %v1799, 7
        %v2123 = vrot.slane %v2122, 2
        %v2124 = vrot.slane %v1798, 7
        %v2125 = vrot.slane %v2124, 2
        %v2126 = vrot.slane %v1800, 7
        %v2127 = vrot.slane %v2126, 2
        %v2128 = vrot.slane %v1808, 7
        %v2129 = vrot.slane %v2128, 2
        %v2130 = vrot.slane %v1816, 7
        %v2131 = vrot.slane %v2130, 2
        %v2132 = vrot.slane %v1815, 7
        %v2133 = vrot.slane %v2132, 2
        %v2134 = vrot.slane %v1817, 7
        %v2135 = vrot.slane %v2134, 2
        %v2136 = vrot.slane %v1825, 7
        %v2137 = vrot.slane %v2136, 2
        %v2138 = vrot.slane %v1833, 7
        %v2139 = vrot.slane %v2138, 2
        %v2140 = vrot.slane %v1832, 7
        %v2141 = vrot.slane %v2140, 2
        %v2142 = vrot.slane %v1834, 7
        %v2143 = vrot.slane %v2142, 2
        %v2144 = vrot.slane %v1842, 7
        %v2145 = vrot.slane %v2144, 2
        %v2146 = vrot.slane %v1850, 7
        %v2147 = vrot.slane %v2146, 2
        %v2148 = vrot.slane %v1849, 7
        %v2149 = vrot.slane %v2148, 2
        %v2150 = vrot.slane %v1851, 7
        %v2151 = vrot.slane %v2150, 2
        %v2152 = vrot.slane %v1859, 7
        %v2153 = vrot.slane %v2152, 2
        %v2154 = vrot.slane %v1867, 7
        %v2155 = vrot.slane %v2154, 2
        %v2156 = vrot.slane %v1866, 7
        %v2157 = vrot.slane %v2156, 2
        %v2158 = vrot.slane %v1868, 7
        %v2159 = vrot.slane %v2158, 2
        %v2160 = vrot.slane %v1876, 7
        %v2161 = vrot.slane %v2160, 2
        %v2162 = vrot.slane %v1884, 7
        %v2163 = vrot.slane %v2162, 2
        %v2164 = vrot.slane %v1883, 7
        %v2165 = vrot.slane %v2164, 2
        %v2166 = vrot.slane %v1885, 7
        %v2167 = vrot.slane %v2166, 2
        %v2168 = vrot.slane %v1893, 7
        %v2169 = vrot.slane %v2168, 2
        %v2170 = vrot.slane %v1901, 7
        %v2171 = vrot.slane %v2170, 2
        %v2172 = vrot.slane %v1900, 7
        %v2173 = vrot.slane %v2172, 2
        %v2174 = vrot.slane %v1902, 7
        %v2175 = vrot.slane %v2174, 2
        %v2176 = vrot.slane %v1910, 7
        %v2177 = vrot.slane %v2176, 2
        %v2178 = vrot.slane %v1918, 7
        %v2179 = vrot.slane %v2178, 2
        %v2180 = vrot.slane %v1917, 7
        %v2181 = vrot.slane %v2180, 2
        %v2182 = vrot.slane %v1919, 7
        %v2183 = vrot.slane %v2182, 2
        %v2184 = vrot.slane %v1927, 7
        %v2185 = vrot.slane %v2184, 2
        %v2186 = vrot.slane %v1935, 7
        %v2187 = vrot.slane %v2186, 2
        %v2188 = vrot.slane %v1934, 7
        %v2189 = vrot.slane %v2188, 2
        %v2190 = vrot.slane %v1936, 7
        %v2191 = vrot.slane %v2190, 2
        %v2192 = vrot.slane %v1944, 7
        %v2193 = vrot.slane %v2192, 2
        %v2194 = vrot.slane %v1952, 7
        %v2195 = vrot.slane %v2194, 2
        %v2196 = vrot.slane %v1951, 7
        %v2197 = vrot.slane %v2196, 2
        %v2198 = vrot.slane %v1953, 7
        %v2199 = vrot.slane %v2198, 2
        %v2200 = vrot.slane %v1961, 7
        %v2201 = vrot.slane %v2200, 2
        %v2202 = vrot.slane %v1969, 7
        %v2203 = vrot.slane %v2202, 2
        %v2204 = vrot.slane %v1968, 7
        %v2205 = vrot.slane %v2204, 2
        %v2206 = vrot.slane %v1970, 7
        %v2207 = vrot.slane %v2206, 2
        %v2208 = vrot.slane %v1978, 7
        %v2209 = vrot.slane %v2208, 2
        %v2210 = vrot.slane %v1986, 7
        %v2211 = vrot.slane %v2210, 2
        %v2212 = vrot.slane %v1985, 7
        %v2213 = vrot.slane %v2212, 2
        %v2214 = vrot.slane %v1987, 7
        %v2215 = vrot.slane %v2214, 2
        %v2216 = vrot.slane %v1995, 7
        %v2217 = vrot.slane %v2216, 2
        %v2218 = vrot.slane %v2003, 7
        %v2219 = vrot.slane %v2218, 2
        %v2220 = vrot.slane %v2002, 7
        %v2221 = vrot.slane %v2220, 2
        %v2222 = vrot.slane %v2004, 7
        %v2223 = vrot.slane %v2222, 2
        %v2224 = vrot.slane %v2012, 7
        %v2225 = vrot.slane %v2224, 2
        %v2226 = vrot.slane %v2020, 7
        %v2227 = vrot.slane %v2226, 2
        %v2228 = vrot.slane %v2019, 7
        %v2229 = vrot.slane %v2228, 2
        %v2230 = vrot.slane %v2021, 7
        %v2231 = vrot.slane %v2230, 2
        %v2232 = vrot.slane %v2029, 7
        %v2233 = vrot.slane %v2232, 2
        %v2234 = vrot.slane %v2037, 7
        %v2235 = vrot.slane %v2234, 2
        %v2236 = vrot.slane %v2036, 7
        %v2237 = vrot.slane %v2236, 2
        %v2238 = vrot.slane %v2038, 7
        %v2239 = vrot.slane %v2238, 2
        %v2240 = vrot.slane %v2046, 7
        %v2241 = vrot.slane %v2240, 2
        %v2242 = vrot.slane %v2054, 7
        %v2243 = vrot.slane %v2242, 2
        %v2244 = vrot.slane %v2053, 7
        %v2245 = vrot.slane %v2244, 2
        %v2246 = vrot.slane %v2055, 7
        %v2247 = vrot.slane %v2246, 2
        %v2312 = vadd.f32 %v1791, %v2121
        %v2313 = vadd.f32 %v1799, %v2123
        %v2314 = vadd.f32 %v1798, %v2125
        %v2315 = vadd.f32 %v1800, %v2127
        %v2316 = vadd.f32 %v1808, %v2129
        %v2317 = vadd.f32 %v1816, %v2131
        %v2318 = vadd.f32 %v1815, %v2133
        %v2319 = vadd.f32 %v1817, %v2135
        %v2320 = vadd.f32 %v1825, %v2137
        %v2321 = vadd.f32 %v1833, %v2139
        %v2322 = vadd.f32 %v1832, %v2141
        %v2323 = vadd.f32 %v1834, %v2143
        %v2324 = vadd.f32 %v1842, %v2145
        %v2325 = vadd.f32 %v1850, %v2147
        %v2326 = vadd.f32 %v1849, %v2149
        %v2327 = vadd.f32 %v1851, %v2151
        %v2328 = vadd.f32 %v1859, %v2153
        %v2329 = vadd.f32 %v1867, %v2155
        %v2330 = vadd.f32 %v1866, %v2157
        %v2331 = vadd.f32 %v1868, %v2159
        %v2332 = vadd.f32 %v1876, %v2161
        %v2333 = vadd.f32 %v1884, %v2163
        %v2334 = vadd.f32 %v1883, %v2165
        %v2335 = vadd.f32 %v1885, %v2167
        %v2336 = vadd.f32 %v1893, %v2169
        %v2337 = vadd.f32 %v1901, %v2171
        %v2338 = vadd.f32 %v1900, %v2173
        %v2339 = vadd.f32 %v1902, %v2175
        %v2340 = vadd.f32 %v1910, %v2177
        %v2341 = vadd.f32 %v1918, %v2179
        %v2342 = vadd.f32 %v1917, %v2181
        %v2343 = vadd.f32 %v1919, %v2183
        %v2344 = vadd.f32 %v1927, %v2185
        %v2345 = vadd.f32 %v1935, %v2187
        %v2346 = vadd.f32 %v1934, %v2189
        %v2347 = vadd.f32 %v1936, %v2191
        %v2348 = vadd.f32 %v1944, %v2193
        %v2349 = vadd.f32 %v1952, %v2195
        %v2350 = vadd.f32 %v1951, %v2197
        %v2351 = vadd.f32 %v1953, %v2199
        %v2352 = vadd.f32 %v1961, %v2201
        %v2353 = vadd.f32 %v1969, %v2203
        %v2354 = vadd.f32 %v1968, %v2205
        %v2355 = vadd.f32 %v1970, %v2207
        %v2356 = vadd.f32 %v1978, %v2209
        %v2357 = vadd.f32 %v1986, %v2211
        %v2358 = vadd.f32 %v1985, %v2213
        %v2359 = vadd.f32 %v1987, %v2215
        %v2360 = vadd.f32 %v1995, %v2217
        %v2361 = vadd.f32 %v2003, %v2219
        %v2362 = vadd.f32 %v2002, %v2221
        %v2363 = vadd.f32 %v2004, %v2223
        %v2364 = vadd.f32 %v2012, %v2225
        %v2365 = vadd.f32 %v2020, %v2227
        %v2366 = vadd.f32 %v2019, %v2229
        %v2367 = vadd.f32 %v2021, %v2231
        %v2368 = vadd.f32 %v2029, %v2233
        %v2369 = vadd.f32 %v2037, %v2235
        %v2370 = vadd.f32 %v2036, %v2237
        %v2371 = vadd.f32 %v2038, %v2239
        %v2372 = vadd.f32 %v2046, %v2241
        %v2373 = vadd.f32 %v2054, %v2243
        %v2374 = vadd.f32 %v2053, %v2245
        %v2375 = vadd.f32 %v2055, %v2247
        %v2376 = vmul.f32 %v2312, 0.25
        %v2377 = vmul.f32 %v2313, 0.25
        %v2378 = vmul.f32 %v2314, 0.25
        %v2379 = vmul.f32 %v2315, 0.25
        %v2380 = vmul.f32 %v2316, 0.25
        %v2381 = vmul.f32 %v2317, 0.25
        %v2382 = vmul.f32 %v2318, 0.25
        %v2383 = vmul.f32 %v2319, 0.25
        %v2384 = vmul.f32 %v2320, 0.25
        %v2385 = vmul.f32 %v2321, 0.25
        %v2386 = vmul.f32 %v2322, 0.25
        %v2387 = vmul.f32 %v2323, 0.25
        %v2388 = vmul.f32 %v2324, 0.25
        %v2389 = vmul.f32 %v2325, 0.25
        %v2390 = vmul.f32 %v2326, 0.25
        %v2391 = vmul.f32 %v2327, 0.25
        %v2392 = vmul.f32 %v2328, 0.25
        %v2393 = vmul.f32 %v2329, 0.25
        %v2394 = vmul.f32 %v2330, 0.25
        %v2395 = vmul.f32 %v2331, 0.25
        %v2396 = vmul.f32 %v2332, 0.25
        %v2397 = vmul.f32 %v2333, 0.25
        %v2398 = vmul.f32 %v2334, 0.25
        %v2399 = vmul.f32 %v2335, 0.25
        %v2400 = vmul.f32 %v2336, 0.25
        %v2401 = vmul.f32 %v2337, 0.25
        %v2402 = vmul.f32 %v2338, 0.25
        %v2403 = vmul.f32 %v2339, 0.25
        %v2404 = vmul.f32 %v2340, 0.25
        %v2405 = vmul.f32 %v2341, 0.25
        %v2406 = vmul.f32 %v2342, 0.25
        %v2407 = vmul.f32 %v2343, 0.25
        %v2408 = vmul.f32 %v2344, 0.25
        %v2409 = vmul.f32 %v2345, 0.25
        %v2410 = vmul.f32 %v2346, 0.25
        %v2411 = vmul.f32 %v2347, 0.25
        %v2412 = vmul.f32 %v2348, 0.25
        %v2413 = vmul.f32 %v2349, 0.25
        %v2414 = vmul.f32 %v2350, 0.25
        %v2415 = vmul.f32 %v2351, 0.25
        %v2416 = vmul.f32 %v2352, 0.25
        %v2417 = vmul.f32 %v2353, 0.25
        %v2418 = vmul.f32 %v2354, 0.25
        %v2419 = vmul.f32 %v2355, 0.25
        %v2420 = vmul.f32 %v2356, 0.25
        %v2421 = vmul.f32 %v2357, 0.25
        %v2422 = vmul.f32 %v2358, 0.25
        %v2423 = vmul.f32 %v2359, 0.25
        %v2424 = vmul.f32 %v2360, 0.25
        %v2425 = vmul.f32 %v2361, 0.25
        %v2426 = vmul.f32 %v2362, 0.25
        %v2427 = vmul.f32 %v2363, 0.25
        %v2428 = vmul.f32 %v2364, 0.25
        %v2429 = vmul.f32 %v2365, 0.25
        %v2430 = vmul.f32 %v2366, 0.25
        %v2431 = vmul.f32 %v2367, 0.25
        %v2432 = vmul.f32 %v2368, 0.25
        %v2433 = vmul.f32 %v2369, 0.25
        %v2434 = vmul.f32 %v2370, 0.25
        %v2435 = vmul.f32 %v2371, 0.25
        %v2436 = vmul.f32 %v2372, 0.25
        %v2437 = vmul.f32 %v2373, 0.25
        %v2438 = vmul.f32 %v2374, 0.25
        %v2439 = vmul.f32 %v2375, 0.25
        %v2440 = vlog2.pop %v2376
        %v2441 = vmul.f32 %v2440, 0.6931472
        %v2442 = vlog2.pop %v2377
        %v2443 = vmul.f32 %v2442, 0.6931472
        %v2444 = vlog2.pop %v2378
        %v2445 = vmul.f32 %v2444, 0.6931472
        %v2446 = vlog2.pop %v2379
        %v2447 = vmul.f32 %v2446, 0.6931472
        %v2448 = vlog2.pop %v2380
        %v2449 = vmul.f32 %v2448, 0.6931472
        %v2450 = vlog2.pop %v2381
        %v2451 = vmul.f32 %v2450, 0.6931472
        %v2452 = vlog2.pop %v2382
        %v2453 = vmul.f32 %v2452, 0.6931472
        %v2454 = vlog2.pop %v2383
        %v2455 = vmul.f32 %v2454, 0.6931472
        %v2456 = vlog2.pop %v2384
        %v2457 = vmul.f32 %v2456, 0.6931472
        %v2458 = vlog2.pop %v2385
        %v2459 = vmul.f32 %v2458, 0.6931472
        %v2460 = vlog2.pop %v2386
        %v2461 = vmul.f32 %v2460, 0.6931472
        %v2462 = vlog2.pop %v2387
        %v2463 = vmul.f32 %v2462, 0.6931472
        %v2464 = vlog2.pop %v2388
        %v2465 = vmul.f32 %v2464, 0.6931472
        %v2466 = vlog2.pop %v2389
        %v2467 = vmul.f32 %v2466, 0.6931472
        %v2468 = vlog2.pop %v2390
        %v2469 = vmul.f32 %v2468, 0.6931472
        %v2470 = vlog2.pop %v2391
        %v2471 = vmul.f32 %v2470, 0.6931472
        %v2472 = vlog2.pop %v2392
        %v2473 = vmul.f32 %v2472, 0.6931472
        %v2474 = vlog2.pop %v2393
        %v2475 = vmul.f32 %v2474, 0.6931472
        %v2476 = vlog2.pop %v2394
        %v2477 = vmul.f32 %v2476, 0.6931472
        %v2478 = vlog2.pop %v2395
        %v2479 = vmul.f32 %v2478, 0.6931472
        %v2480 = vlog2.pop %v2396
        %v2481 = vmul.f32 %v2480, 0.6931472
        %v2482 = vlog2.pop %v2397
        %v2483 = vmul.f32 %v2482, 0.6931472
        %v2484 = vlog2.pop %v2398
        %v2485 = vmul.f32 %v2484, 0.6931472
        %v2486 = vlog2.pop %v2399
        %v2487 = vmul.f32 %v2486, 0.6931472
        %v2488 = vlog2.pop %v2400
        %v2489 = vmul.f32 %v2488, 0.6931472
        %v2490 = vlog2.pop %v2401
        %v2491 = vmul.f32 %v2490, 0.6931472
        %v2492 = vlog2.pop %v2402
        %v2493 = vmul.f32 %v2492, 0.6931472
        %v2494 = vlog2.pop %v2403
        %v2495 = vmul.f32 %v2494, 0.6931472
        %v2496 = vlog2.pop %v2404
        %v2497 = vmul.f32 %v2496, 0.6931472
        %v2498 = vlog2.pop %v2405
        %v2499 = vmul.f32 %v2498, 0.6931472
        %v2500 = vlog2.pop %v2406
        %v2501 = vmul.f32 %v2500, 0.6931472
        %v2502 = vlog2.pop %v2407
        %v2503 = vmul.f32 %v2502, 0.6931472
        %v2504 = vlog2.pop %v2408
        %v2505 = vmul.f32 %v2504, 0.6931472
        %v2506 = vlog2.pop %v2409
        %v2507 = vmul.f32 %v2506, 0.6931472
        %v2508 = vlog2.pop %v2410
        %v2509 = vmul.f32 %v2508, 0.6931472
        %v2510 = vlog2.pop %v2411
        %v2511 = vmul.f32 %v2510, 0.6931472
        %v2512 = vlog2.pop %v2412
        %v2513 = vmul.f32 %v2512, 0.6931472
        %v2514 = vlog2.pop %v2413
        %v2515 = vmul.f32 %v2514, 0.6931472
        %v2516 = vlog2.pop %v2414
        %v2517 = vmul.f32 %v2516, 0.6931472
        %v2518 = vlog2.pop %v2415
        %v2519 = vmul.f32 %v2518, 0.6931472
        %v2520 = vlog2.pop %v2416
        %v2521 = vmul.f32 %v2520, 0.6931472
        %v2522 = vlog2.pop %v2417
        %v2523 = vmul.f32 %v2522, 0.6931472
        %v2524 = vlog2.pop %v2418
        %v2525 = vmul.f32 %v2524, 0.6931472
        %v2526 = vlog2.pop %v2419
        %v2527 = vmul.f32 %v2526, 0.6931472
        %v2528 = vlog2.pop %v2420
        %v2529 = vmul.f32 %v2528, 0.6931472
        %v2530 = vlog2.pop %v2421
        %v2531 = vmul.f32 %v2530, 0.6931472
        %v2532 = vlog2.pop %v2422
        %v2533 = vmul.f32 %v2532, 0.6931472
        %v2534 = vlog2.pop %v2423
        %v2535 = vmul.f32 %v2534, 0.6931472
        %v2536 = vlog2.pop %v2424
        %v2537 = vmul.f32 %v2536, 0.6931472
        %v2538 = vlog2.pop %v2425
        %v2539 = vmul.f32 %v2538, 0.6931472
        %v2540 = vlog2.pop %v2426
        %v2541 = vmul.f32 %v2540, 0.6931472
        %v2542 = vlog2.pop %v2427
        %v2543 = vmul.f32 %v2542, 0.6931472
        %v2544 = vlog2.pop %v2428
        %v2545 = vmul.f32 %v2544, 0.6931472
        %v2546 = vlog2.pop %v2429
        %v2547 = vmul.f32 %v2546, 0.6931472
        %v2548 = vlog2.pop %v2430
        %v2549 = vmul.f32 %v2548, 0.6931472
        %v2550 = vlog2.pop %v2431
        %v2551 = vmul.f32 %v2550, 0.6931472
        %v2552 = vlog2.pop %v2432
        %v2553 = vmul.f32 %v2552, 0.6931472
        %v2554 = vlog2.pop %v2433
        %v2555 = vmul.f32 %v2554, 0.6931472
        %v2556 = vlog2.pop %v2434
        %v2557 = vmul.f32 %v2556, 0.6931472
        %v2558 = vlog2.pop %v2435
        %v2559 = vmul.f32 %v2558, 0.6931472
        %v2560 = vlog2.pop %v2436
        %v2561 = vmul.f32 %v2560, 0.6931472
        %v2562 = vlog2.pop %v2437
        %v2563 = vmul.f32 %v2562, 0.6931472
        %v2564 = vlog2.pop %v2438
        %v2565 = vmul.f32 %v2564, 0.6931472
        %v2566 = vlog2.pop %v2439
        %v2567 = vmul.f32 %v2566, 0.6931472
        %v2568 = vstv %s262
        %v2569 = vmul.f32 %v2441, %v2568
        %v2570 = vmul.f32 %v2443, %v2568
        %v2571 = vmul.f32 %v2445, %v2568
        %v2572 = vmul.f32 %v2447, %v2568
        %v2573 = vmul.f32 %v2449, %v2568
        %v2574 = vmul.f32 %v2451, %v2568
        %v2575 = vmul.f32 %v2453, %v2568
        %v2576 = vmul.f32 %v2455, %v2568
        %v2577 = vmul.f32 %v2457, %v2568
        %v2578 = vmul.f32 %v2459, %v2568
        %v2579 = vmul.f32 %v2461, %v2568
        %v2580 = vmul.f32 %v2463, %v2568
        %v2581 = vmul.f32 %v2465, %v2568
        %v2582 = vmul.f32 %v2467, %v2568
        %v2583 = vmul.f32 %v2469, %v2568
        %v2584 = vmul.f32 %v2471, %v2568
        %v2585 = vmul.f32 %v2473, %v2568
        %v2586 = vmul.f32 %v2475, %v2568
        %v2587 = vmul.f32 %v2477, %v2568
        %v2588 = vmul.f32 %v2479, %v2568
        %v2589 = vmul.f32 %v2481, %v2568
        %v2590 = vmul.f32 %v2483, %v2568
        %v2591 = vmul.f32 %v2485, %v2568
        %v2592 = vmul.f32 %v2487, %v2568
        %v2593 = vmul.f32 %v2489, %v2568
        %v2594 = vmul.f32 %v2491, %v2568
        %v2595 = vmul.f32 %v2493, %v2568
        %v2596 = vmul.f32 %v2495, %v2568
        %v2597 = vmul.f32 %v2497, %v2568
        %v2598 = vmul.f32 %v2499, %v2568
        %v2599 = vmul.f32 %v2501, %v2568
        %v2600 = vmul.f32 %v2503, %v2568
        %v2601 = vmul.f32 %v2505, %v2568
        %v2602 = vmul.f32 %v2507, %v2568
        %v2603 = vmul.f32 %v2509, %v2568
        %v2604 = vmul.f32 %v2511, %v2568
        %v2605 = vmul.f32 %v2513, %v2568
        %v2606 = vmul.f32 %v2515, %v2568
        %v2607 = vmul.f32 %v2517, %v2568
        %v2608 = vmul.f32 %v2519, %v2568
        %v2609 = vmul.f32 %v2521, %v2568
        %v2610 = vmul.f32 %v2523, %v2568
        %v2611 = vmul.f32 %v2525, %v2568
        %v2612 = vmul.f32 %v2527, %v2568
        %v2613 = vmul.f32 %v2529, %v2568
        %v2614 = vmul.f32 %v2531, %v2568
        %v2615 = vmul.f32 %v2533, %v2568
        %v2616 = vmul.f32 %v2535, %v2568
        %v2617 = vmul.f32 %v2537, %v2568
        %v2618 = vmul.f32 %v2539, %v2568
        %v2619 = vmul.f32 %v2541, %v2568
        %v2620 = vmul.f32 %v2543, %v2568
        %v2621 = vmul.f32 %v2545, %v2568
        %v2622 = vmul.f32 %v2547, %v2568
        %v2623 = vmul.f32 %v2549, %v2568
        %v2624 = vmul.f32 %v2551, %v2568
        %v2625 = vmul.f32 %v2553, %v2568
        %v2626 = vmul.f32 %v2555, %v2568
        %v2627 = vmul.f32 %v2557, %v2568
        %v2628 = vmul.f32 %v2559, %v2568
        %v2629 = vmul.f32 %v2561, %v2568
        %v2630 = vmul.f32 %v2563, %v2568
        %v2631 = vmul.f32 %v2565, %v2568
        %v2632 = vmul.f32 %v2567, %v2568
        %v2633 = vmul.f32 %v2569, 1.442695
        %v2634 = vpow.pop %v2633
        %v2635 = vmul.f32 %v2570, 1.442695
        %v2636 = vpow.pop %v2635
        %v2637 = vmul.f32 %v2571, 1.442695
        %v2638 = vpow.pop %v2637
        %v2639 = vmul.f32 %v2572, 1.442695
        %v2640 = vpow.pop %v2639
        %v2641 = vmul.f32 %v2573, 1.442695
        %v2642 = vpow.pop %v2641
        %v2643 = vmul.f32 %v2574, 1.442695
        %v2644 = vpow.pop %v2643
        %v2645 = vmul.f32 %v2575, 1.442695
        %v2646 = vpow.pop %v2645
        %v2647 = vmul.f32 %v2576, 1.442695
        %v2648 = vpow.pop %v2647
        %v2649 = vmul.f32 %v2577, 1.442695
        %v2650 = vpow.pop %v2649
        %v2651 = vmul.f32 %v2578, 1.442695
        %v2652 = vpow.pop %v2651
        %v2653 = vmul.f32 %v2579, 1.442695
        %v2654 = vpow.pop %v2653
        %v2655 = vmul.f32 %v2580, 1.442695
        %v2656 = vpow.pop %v2655
        %v2657 = vmul.f32 %v2581, 1.442695
        %v2658 = vpow.pop %v2657
        %v2659 = vmul.f32 %v2582, 1.442695
        %v2660 = vpow.pop %v2659
        %v2661 = vmul.f32 %v2583, 1.442695
        %v2662 = vpow.pop %v2661
        %v2663 = vmul.f32 %v2584, 1.442695
        %v2664 = vpow.pop %v2663
        %v2665 = vmul.f32 %v2585, 1.442695
        %v2666 = vpow.pop %v2665
        %v2667 = vmul.f32 %v2586, 1.442695
        %v2668 = vpow.pop %v2667
        %v2669 = vmul.f32 %v2587, 1.442695
        %v2670 = vpow.pop %v2669
        %v2671 = vmul.f32 %v2588, 1.442695
        %v2672 = vpow.pop %v2671
        %v2673 = vmul.f32 %v2589, 1.442695
        %v2674 = vpow.pop %v2673
        %v2675 = vmul.f32 %v2590, 1.442695
        %v2676 = vpow.pop %v2675
        %v2677 = vmul.f32 %v2591, 1.442695
        %v2678 = vpow.pop %v2677
        %v2679 = vmul.f32 %v2592, 1.442695
        %v2680 = vpow.pop %v2679
        %v2681 = vmul.f32 %v2593, 1.442695
        %v2682 = vpow.pop %v2681
        %v2683 = vmul.f32 %v2594, 1.442695
        %v2684 = vpow.pop %v2683
        %v2685 = vmul.f32 %v2595, 1.442695
        %v2686 = vpow.pop %v2685
        %v2687 = vmul.f32 %v2596, 1.442695
        %v2688 = vpow.pop %v2687
        %v2689 = vmul.f32 %v2597, 1.442695
        %v2690 = vpow.pop %v2689
        %v2691 = vmul.f32 %v2598, 1.442695
        %v2692 = vpow.pop %v2691
        %v2693 = vmul.f32 %v2599, 1.442695
        %v2694 = vpow.pop %v2693
        %v2695 = vmul.f32 %v2600, 1.442695
        %v2696 = vpow.pop %v2695
        %v2697 = vmul.f32 %v2601, 1.442695
        %v2698 = vpow.pop %v2697
        %v2699 = vmul.f32 %v2602, 1.442695
        %v2700 = vpow.pop %v2699
        %v2701 = vmul.f32 %v2603, 1.442695
        %v2702 = vpow.pop %v2701
        %v2703 = vmul.f32 %v2604, 1.442695
        %v2704 = vpow.pop %v2703
        %v2705 = vmul.f32 %v2605, 1.442695
        %v2706 = vpow.pop %v2705
        %v2707 = vmul.f32 %v2606, 1.442695
        %v2708 = vpow.pop %v2707
        %v2709 = vmul.f32 %v2607, 1.442695
        %v2710 = vpow.pop %v2709
        %v2711 = vmul.f32 %v2608, 1.442695
        %v2712 = vpow.pop %v2711
        %v2713 = vmul.f32 %v2609, 1.442695
        %v2714 = vpow.pop %v2713
        %v2715 = vmul.f32 %v2610, 1.442695
        %v2716 = vpow.pop %v2715
        %v2717 = vmul.f32 %v2611, 1.442695
        %v2718 = vpow.pop %v2717
        %v2719 = vmul.f32 %v2612, 1.442695
        %v2720 = vpow.pop %v2719
        %v2721 = vmul.f32 %v2613, 1.442695
        %v2722 = vpow.pop %v2721
        %v2723 = vmul.f32 %v2614, 1.442695
        %v2724 = vpow.pop %v2723
        %v2725 = vmul.f32 %v2615, 1.442695
        %v2726 = vpow.pop %v2725
        %v2727 = vmul.f32 %v2616, 1.442695
        %v2728 = vpow.pop %v2727
        %v2729 = vmul.f32 %v2617, 1.442695
        %v2730 = vpow.pop %v2729
        %v2731 = vmul.f32 %v2618, 1.442695
        %v2732 = vpow.pop %v2731
        %v2733 = vmul.f32 %v2619, 1.442695
        %v2734 = vpow.pop %v2733
        %v2735 = vmul.f32 %v2620, 1.442695
        %v2736 = vpow.pop %v2735
        %v2737 = vmul.f32 %v2621, 1.442695
        %v2738 = vpow.pop %v2737
        %v2739 = vmul.f32 %v2622, 1.442695
        %v2740 = vpow.pop %v2739
        %v2741 = vmul.f32 %v2623, 1.442695
        %v2742 = vpow.pop %v2741
        %v2743 = vmul.f32 %v2624, 1.442695
        %v2744 = vpow.pop %v2743
        %v2745 = vmul.f32 %v2625, 1.442695
        %v2746 = vpow.pop %v2745
        %v2747 = vmul.f32 %v2626, 1.442695
        %v2748 = vpow.pop %v2747
        %v2749 = vmul.f32 %v2627, 1.442695
        %v2750 = vpow.pop %v2749
        %v2751 = vmul.f32 %v2628, 1.442695
        %v2752 = vpow.pop %v2751
        %v2753 = vmul.f32 %v2629, 1.442695
        %v2754 = vpow.pop %v2753
        %v2755 = vmul.f32 %v2630, 1.442695
        %v2756 = vpow.pop %v2755
        %v2757 = vmul.f32 %v2631, 1.442695
        %v2758 = vpow.pop %v2757
        %v2759 = vmul.f32 %v2632, 1.442695
        %v2760 = vpow.pop %v2759
        %v2825 = vlaneseq
        %v2826 = vshrl.u32 %v2825, 7
        %v2827 = vsub.s32 0, %v2826
        %v2828 = vrot.slane %v2634, %v2827
        %v2829 = vlaneseq
        %v2830 = vshrl.u32 %v2829, 7
        %v2831 = vsub.s32 0, %v2830
        %v2832 = vrot.slane %v2636, %v2831
        %v2833 = vlaneseq
        %v2834 = vshrl.u32 %v2833, 7
        %v2835 = vsub.s32 0, %v2834
        %v2836 = vrot.slane %v2638, %v2835
        %v2837 = vlaneseq
        %v2838 = vshrl.u32 %v2837, 7
        %v2839 = vsub.s32 0, %v2838
        %v2840 = vrot.slane %v2640, %v2839
        %v2841 = vlaneseq
        %v2842 = vshrl.u32 %v2841, 7
        %v2843 = vsub.s32 0, %v2842
        %v2844 = vrot.slane %v2642, %v2843
        %v2845 = vlaneseq
        %v2846 = vshrl.u32 %v2845, 7
        %v2847 = vsub.s32 0, %v2846
        %v2848 = vrot.slane %v2644, %v2847
        %v2849 = vlaneseq
        %v2850 = vshrl.u32 %v2849, 7
        %v2851 = vsub.s32 0, %v2850
        %v2852 = vrot.slane %v2646, %v2851
        %v2853 = vlaneseq
        %v2854 = vshrl.u32 %v2853, 7
        %v2855 = vsub.s32 0, %v2854
        %v2856 = vrot.slane %v2648, %v2855
        %v2857 = vlaneseq
        %v2858 = vshrl.u32 %v2857, 7
        %v2859 = vsub.s32 0, %v2858
        %v2860 = vrot.slane %v2650, %v2859
        %v2861 = vlaneseq
        %v2862 = vshrl.u32 %v2861, 7
        %v2863 = vsub.s32 0, %v2862
        %v2864 = vrot.slane %v2652, %v2863
        %v2865 = vlaneseq
        %v2866 = vshrl.u32 %v2865, 7
        %v2867 = vsub.s32 0, %v2866
        %v2868 = vrot.slane %v2654, %v2867
        %v2869 = vlaneseq
        %v2870 = vshrl.u32 %v2869, 7
        %v2871 = vsub.s32 0, %v2870
        %v2872 = vrot.slane %v2656, %v2871
        %v2873 = vlaneseq
        %v2874 = vshrl.u32 %v2873, 7
        %v2875 = vsub.s32 0, %v2874
        %v2876 = vrot.slane %v2658, %v2875
        %v2877 = vlaneseq
        %v2878 = vshrl.u32 %v2877, 7
        %v2879 = vsub.s32 0, %v2878
        %v2880 = vrot.slane %v2660, %v2879
        %v2881 = vlaneseq
        %v2882 = vshrl.u32 %v2881, 7
        %v2883 = vsub.s32 0, %v2882
        %v2884 = vrot.slane %v2662, %v2883
        %v2885 = vlaneseq
        %v2886 = vshrl.u32 %v2885, 7
        %v2887 = vsub.s32 0, %v2886
        %v2888 = vrot.slane %v2664, %v2887
        %v2889 = vlaneseq
        %v2890 = vshrl.u32 %v2889, 7
        %v2891 = vsub.s32 0, %v2890
        %v2892 = vrot.slane %v2666, %v2891
        %v2893 = vlaneseq
        %v2894 = vshrl.u32 %v2893, 7
        %v2895 = vsub.s32 0, %v2894
        %v2896 = vrot.slane %v2668, %v2895
        %v2897 = vlaneseq
        %v2898 = vshrl.u32 %v2897, 7
        %v2899 = vsub.s32 0, %v2898
        %v2900 = vrot.slane %v2670, %v2899
        %v2901 = vlaneseq
        %v2902 = vshrl.u32 %v2901, 7
        %v2903 = vsub.s32 0, %v2902
        %v2904 = vrot.slane %v2672, %v2903
        %v2905 = vlaneseq
        %v2906 = vshrl.u32 %v2905, 7
        %v2907 = vsub.s32 0, %v2906
        %v2908 = vrot.slane %v2674, %v2907
        %v2909 = vlaneseq
        %v2910 = vshrl.u32 %v2909, 7
        %v2911 = vsub.s32 0, %v2910
        %v2912 = vrot.slane %v2676, %v2911
        %v2913 = vlaneseq
        %v2914 = vshrl.u32 %v2913, 7
        %v2915 = vsub.s32 0, %v2914
        %v2916 = vrot.slane %v2678, %v2915
        %v2917 = vlaneseq
        %v2918 = vshrl.u32 %v2917, 7
        %v2919 = vsub.s32 0, %v2918
        %v2920 = vrot.slane %v2680, %v2919
        %v2921 = vlaneseq
        %v2922 = vshrl.u32 %v2921, 7
        %v2923 = vsub.s32 0, %v2922
        %v2924 = vrot.slane %v2682, %v2923
        %v2925 = vlaneseq
        %v2926 = vshrl.u32 %v2925, 7
        %v2927 = vsub.s32 0, %v2926
        %v2928 = vrot.slane %v2684, %v2927
        %v2929 = vlaneseq
        %v2930 = vshrl.u32 %v2929, 7
        %v2931 = vsub.s32 0, %v2930
        %v2932 = vrot.slane %v2686, %v2931
        %v2933 = vlaneseq
        %v2934 = vshrl.u32 %v2933, 7
        %v2935 = vsub.s32 0, %v2934
        %v2936 = vrot.slane %v2688, %v2935
        %v2937 = vlaneseq
        %v2938 = vshrl.u32 %v2937, 7
        %v2939 = vsub.s32 0, %v2938
        %v2940 = vrot.slane %v2690, %v2939
        %v2941 = vlaneseq
        %v2942 = vshrl.u32 %v2941, 7
        %v2943 = vsub.s32 0, %v2942
        %v2944 = vrot.slane %v2692, %v2943
        %v2945 = vlaneseq
        %v2946 = vshrl.u32 %v2945, 7
        %v2947 = vsub.s32 0, %v2946
        %v2948 = vrot.slane %v2694, %v2947
        %v2949 = vlaneseq
        %v2950 = vshrl.u32 %v2949, 7
        %v2951 = vsub.s32 0, %v2950
        %v2952 = vrot.slane %v2696, %v2951
        %v2953 = vlaneseq
        %v2954 = vshrl.u32 %v2953, 7
        %v2955 = vsub.s32 0, %v2954
        %v2956 = vrot.slane %v2698, %v2955
        %v2957 = vlaneseq
        %v2958 = vshrl.u32 %v2957, 7
        %v2959 = vsub.s32 0, %v2958
        %v2960 = vrot.slane %v2700, %v2959
        %v2961 = vlaneseq
        %v2962 = vshrl.u32 %v2961, 7
        %v2963 = vsub.s32 0, %v2962
        %v2964 = vrot.slane %v2702, %v2963
        %v2965 = vlaneseq
        %v2966 = vshrl.u32 %v2965, 7
        %v2967 = vsub.s32 0, %v2966
        %v2968 = vrot.slane %v2704, %v2967
        %v2969 = vlaneseq
        %v2970 = vshrl.u32 %v2969, 7
        %v2971 = vsub.s32 0, %v2970
        %v2972 = vrot.slane %v2706, %v2971
        %v2973 = vlaneseq
        %v2974 = vshrl.u32 %v2973, 7
        %v2975 = vsub.s32 0, %v2974
        %v2976 = vrot.slane %v2708, %v2975
        %v2977 = vlaneseq
        %v2978 = vshrl.u32 %v2977, 7
        %v2979 = vsub.s32 0, %v2978
        %v2980 = vrot.slane %v2710, %v2979
        %v2981 = vlaneseq
        %v2982 = vshrl.u32 %v2981, 7
        %v2983 = vsub.s32 0, %v2982
        %v2984 = vrot.slane %v2712, %v2983
        %v2985 = vlaneseq
        %v2986 = vshrl.u32 %v2985, 7
        %v2987 = vsub.s32 0, %v2986
        %v2988 = vrot.slane %v2714, %v2987
        %v2989 = vlaneseq
        %v2990 = vshrl.u32 %v2989, 7
        %v2991 = vsub.s32 0, %v2990
        %v2992 = vrot.slane %v2716, %v2991
        %v2993 = vlaneseq
        %v2994 = vshrl.u32 %v2993, 7
        %v2995 = vsub.s32 0, %v2994
        %v2996 = vrot.slane %v2718, %v2995
        %v2997 = vlaneseq
        %v2998 = vshrl.u32 %v2997, 7
        %v2999 = vsub.s32 0, %v2998
        %v3000 = vrot.slane %v2720, %v2999
        %v3001 = vlaneseq
        %v3002 = vshrl.u32 %v3001, 7
        %v3003 = vsub.s32 0, %v3002
        %v3004 = vrot.slane %v2722, %v3003
        %v3005 = vlaneseq
        %v3006 = vshrl.u32 %v3005, 7
        %v3007 = vsub.s32 0, %v3006
        %v3008 = vrot.slane %v2724, %v3007
        %v3009 = vlaneseq
        %v3010 = vshrl.u32 %v3009, 7
        %v3011 = vsub.s32 0, %v3010
        %v3012 = vrot.slane %v2726, %v3011
        %v3013 = vlaneseq
        %v3014 = vshrl.u32 %v3013, 7
        %v3015 = vsub.s32 0, %v3014
        %v3016 = vrot.slane %v2728, %v3015
        %v3017 = vlaneseq
        %v3018 = vshrl.u32 %v3017, 7
        %v3019 = vsub.s32 0, %v3018
        %v3020 = vrot.slane %v2730, %v3019
        %v3021 = vlaneseq
        %v3022 = vshrl.u32 %v3021, 7
        %v3023 = vsub.s32 0, %v3022
        %v3024 = vrot.slane %v2732, %v3023
        %v3025 = vlaneseq
        %v3026 = vshrl.u32 %v3025, 7
        %v3027 = vsub.s32 0, %v3026
        %v3028 = vrot.slane %v2734, %v3027
        %v3029 = vlaneseq
        %v3030 = vshrl.u32 %v3029, 7
        %v3031 = vsub.s32 0, %v3030
        %v3032 = vrot.slane %v2736, %v3031
        %v3033 = vlaneseq
        %v3034 = vshrl.u32 %v3033, 7
        %v3035 = vsub.s32 0, %v3034
        %v3036 = vrot.slane %v2738, %v3035
        %v3037 = vlaneseq
        %v3038 = vshrl.u32 %v3037, 7
        %v3039 = vsub.s32 0, %v3038
        %v3040 = vrot.slane %v2740, %v3039
        %v3041 = vlaneseq
        %v3042 = vshrl.u32 %v3041, 7
        %v3043 = vsub.s32 0, %v3042
        %v3044 = vrot.slane %v2742, %v3043
        %v3045 = vlaneseq
        %v3046 = vshrl.u32 %v3045, 7
        %v3047 = vsub.s32 0, %v3046
        %v3048 = vrot.slane %v2744, %v3047
        %v3049 = vlaneseq
        %v3050 = vshrl.u32 %v3049, 7
        %v3051 = vsub.s32 0, %v3050
        %v3052 = vrot.slane %v2746, %v3051
        %v3053 = vlaneseq
        %v3054 = vshrl.u32 %v3053, 7
        %v3055 = vsub.s32 0, %v3054
        %v3056 = vrot.slane %v2748, %v3055
        %v3057 = vlaneseq
        %v3058 = vshrl.u32 %v3057, 7
        %v3059 = vsub.s32 0, %v3058
        %v3060 = vrot.slane %v2750, %v3059
        %v3061 = vlaneseq
        %v3062 = vshrl.u32 %v3061, 7
        %v3063 = vsub.s32 0, %v3062
        %v3064 = vrot.slane %v2752, %v3063
        %v3065 = vlaneseq
        %v3066 = vshrl.u32 %v3065, 7
        %v3067 = vsub.s32 0, %v3066
        %v3068 = vrot.slane %v2754, %v3067
        %v3069 = vlaneseq
        %v3070 = vshrl.u32 %v3069, 7
        %v3071 = vsub.s32 0, %v3070
        %v3072 = vrot.slane %v2756, %v3071
        %v3073 = vlaneseq
        %v3074 = vshrl.u32 %v3073, 7
        %v3075 = vsub.s32 0, %v3074
        %v3076 = vrot.slane %v2758, %v3075
        %v3077 = vlaneseq
        %v3078 = vshrl.u32 %v3077, 7
        %v3079 = vsub.s32 0, %v3078
        %v3080 = vrot.slane %v2760, %v3079
        %vm3081 = vcmask 1041409
        %v3082 = vsel %vm3081, %v2832, %v2828
        %vm3083 = vcmask 1042434
        %v3084 = vsel %vm3083, %v2836, %v3082
        %vm3085 = vcmask 1043459
        %v3086 = vsel %vm3085, %v2840, %v3084
        %vm3087 = vcmask 1044484
        %v3088 = vsel %vm3087, %v2844, %v3086
        %vm3089 = vcmask 1045509
        %v3090 = vsel %vm3089, %v2848, %v3088
        %vm3091 = vcmask 1046534
        %v3092 = vsel %vm3091, %v2852, %v3090
        %vm3093 = vcmask 1047559
        %v3094 = vsel %vm3093, %v2856, %v3092
        %v3095 = vsel %vm3081, %v2864, %v2860
        %v3096 = vsel %vm3083, %v2868, %v3095
        %v3097 = vsel %vm3085, %v2872, %v3096
        %v3098 = vsel %vm3087, %v2876, %v3097
        %v3099 = vsel %vm3089, %v2880, %v3098
        %v3100 = vsel %vm3091, %v2884, %v3099
        %v3101 = vsel %vm3093, %v2888, %v3100
        %v3102 = vsel %vm3081, %v2896, %v2892
        %v3103 = vsel %vm3083, %v2900, %v3102
        %v3104 = vsel %vm3085, %v2904, %v3103
        %v3105 = vsel %vm3087, %v2908, %v3104
        %v3106 = vsel %vm3089, %v2912, %v3105
        %v3107 = vsel %vm3091, %v2916, %v3106
        %v3108 = vsel %vm3093, %v2920, %v3107
        %v3109 = vsel %vm3081, %v2928, %v2924
        %v3110 = vsel %vm3083, %v2932, %v3109
        %v3111 = vsel %vm3085, %v2936, %v3110
        %v3112 = vsel %vm3087, %v2940, %v3111
        %v3113 = vsel %vm3089, %v2944, %v3112
        %v3114 = vsel %vm3091, %v2948, %v3113
        %v3115 = vsel %vm3093, %v2952, %v3114
        %v3116 = vsel %vm3081, %v2960, %v2956
        %v3117 = vsel %vm3083, %v2964, %v3116
        %v3118 = vsel %vm3085, %v2968, %v3117
        %v3119 = vsel %vm3087, %v2972, %v3118
        %v3120 = vsel %vm3089, %v2976, %v3119
        %v3121 = vsel %vm3091, %v2980, %v3120
        %v3122 = vsel %vm3093, %v2984, %v3121
        %v3123 = vsel %vm3081, %v2992, %v2988
        %v3124 = vsel %vm3083, %v2996, %v3123
        %v3125 = vsel %vm3085, %v3000, %v3124
        %v3126 = vsel %vm3087, %v3004, %v3125
        %v3127 = vsel %vm3089, %v3008, %v3126
        %v3128 = vsel %vm3091, %v3012, %v3127
        %v3129 = vsel %vm3093, %v3016, %v3128
        %v3130 = vsel %vm3081, %v3024, %v3020
        %v3131 = vsel %vm3083, %v3028, %v3130
        %v3132 = vsel %vm3085, %v3032, %v3131
        %v3133 = vsel %vm3087, %v3036, %v3132
        %v3134 = vsel %vm3089, %v3040, %v3133
        %v3135 = vsel %vm3091, %v3044, %v3134
        %v3136 = vsel %vm3093, %v3048, %v3135
        %v3137 = vsel %vm3081, %v3056, %v3052
        %v3138 = vsel %vm3083, %v3060, %v3137
        %v3139 = vsel %vm3085, %v3064, %v3138
        %v3140 = vsel %vm3087, %v3068, %v3139
        %v3141 = vsel %vm3089, %v3072, %v3140
        %v3142 = vsel %vm3091, %v3076, %v3141
        %v3143 = vsel %vm3093, %v3080, %v3142
        %vm3152 = vcmask 523264
        %3153 = vst.msk [vmem:[%s258] sm:$0xff] %vm3152, %v3094
        %3154 = vst.msk [vmem:[%s258 + $0x8] sm:$0xff] %vm3152, %v3101
        %3155 = vst.msk [vmem:[%s258 + $0x10] sm:$0xff] %vm3152, %v3108
        %3156 = vst.msk [vmem:[%s258 + $0x18] sm:$0xff] %vm3152, %v3115
        %3157 = vst.msk [vmem:[%s258 + $0x20] sm:$0xff] %vm3152, %v3122
        %3158 = vst.msk [vmem:[%s258 + $0x28] sm:$0xff] %vm3152, %v3129
        %3159 = vst.msk [vmem:[%s258 + $0x30] sm:$0xff] %vm3152, %v3136
        %3160 = vst.msk [vmem:[%s258 + $0x38] sm:$0xff] %vm3152, %v3143
        %s3161 = sand.u32 %s142, 1
        %s3162 = scalar_lea.sflag [#allocation6], %s3161
        %s3163 = sand.u32 %s142, 1
        %s3164 = smul.addr %s3163, 64
        %s3165 = scalar_lea.vmem [#allocation9], %s3164
        // Predicated region
        $region49: #{tpu_custom_call.1} parent=39 // pred_check
          %p3166 = pneg %p152
        $region50: #{tpu_custom_call.1} parent=39 // pred_check_branch
          %3168 = sbr.rel (%p3166) target = $region52
        $region51: #{tpu_custom_call.1} parent=39 // pred_region
          %s3170 = ssub.s32 1024, 1024
          %3171 = vsyncadd %s3162, %s3170
          %s3172 = smul.addr %s24, 8
          %s3173 = smul.addr %s3172, 128
          %s3174 = scalar_lea.hbm %s5, %s3173
          %s3175 = sshll.u32 %s3165, 4
          %s3176 = int_to_ptr.vmem [resolvable:$true] %s3175
          %3181 = dma.vmem_to_hbm [thread:$0]  %s3176, 1024, %s3174, %s3162, 128, 128, 8
        $region52: #{tpu_custom_call.1} parent=39 // pred_fallthru
          _
      $region40: #{tpu_custom_call.1} parent=5 // pred_fallthru
        _
      %p3182 = scmp.le.s32.totalorder 2, %s19
      // Predicated region
      $region53: #{tpu_custom_call.1} parent=5 // pred_check
        %p3183 = pneg %p3182
      $region54: #{tpu_custom_call.1} parent=5 // pred_check_branch
        %3185 = sbr.rel (%p3183) target = $region56
      $region55: #{tpu_custom_call.1} parent=5 // pred_region
        %s3186 = ssub.s32 %s19, 2
        // Predicated region
        $region57: #{tpu_custom_call.1} parent=55 // pred_check
          %p3187 = pneg %p158
        $region58: #{tpu_custom_call.1} parent=55 // pred_check_branch
          %3189 = sbr.rel (%p3187) target = $region60
        $region59: #{tpu_custom_call.1} parent=55 // pred_region
          %s3190 = sand.u32 %s143, 1
          %s3191 = scalar_lea.sflag [#allocation6], %s3190
          %s3192 = sand.u32 %s143, 1
          %s3193 = smul.addr %s3192, 64
          %s3194 = scalar_lea.vmem [#allocation9], %s3193
          %3195 = dma.done %s3191, 1024
        $region60: #{tpu_custom_call.1} parent=55 // pred_fallthru
          _
      $region56: #{tpu_custom_call.1} parent=5 // pred_fallthru
        _
    $region6: #{tpu_custom_call.1} parent=1 // loop_footer
      %s23 = sadd.s32 1, %s19
    $region7: #{tpu_custom_call.1} parent=1 // loop_footer_branch
      %18 = sbr.rel target = $region3
    $region8: #{tpu_custom_call.1} parent=1 // loop_exit
      _
    %3196 = vsyncpa [#allocation5], 1
    %s3197 = scalar_lea.sflag [#allocation5], 1
    %3198 = vsyncpa %s3197, 1
    %3199 = vsyncpa [#allocation8], 1
    %3200 = vsyncpa [#allocation6], 1
    %s3201 = scalar_lea.sflag [#allocation6], 1
    %3202 = vsyncpa %s3201, 1

</llo_original>
